<compile_context>
chip_gen: v7x
topology: tpu7x:2x2x1
jax: 0.10.0
libtpu: 0.0.40
codegen_flags: <defaults>
</compile_context>

<pallas_src>
import functools

import jax
import jax.numpy as jnp
from jax.experimental import pallas as pl
from jax.experimental.pallas import tpu as pltpu


# --------------------------- fused encoder kernel ---------------------------
def lstm_encoder_kernel(x_ref, wih_ref, whh_ref, b_ref, whead_ref, bhead_ref,
                        eps_ref, outs_ref, last_ref, mulv_ref, z_ref,
                        *, T, H, L, matmul_dtype):
    # x_ref:     [T*B, D]   time-major, flattened (B padded to sublane multiple)
    # wih_ref:   [D, 4H]
    # whh_ref:   [H, 4H]
    # b_ref:     [1, 4H]    (b_ih + b_hh)
    # whead_ref: [H, 2L]    (W_mu | W_logvar)
    # bhead_ref: [1, 2L]
    # eps_ref:   [B, L]
    # outs_ref:  [B, T*H]   lane-dense packed per-step hidden states
    # last_ref:  [B, H]
    # mulv_ref:  [B, 2L]    (mu | logvar)
    # z_ref:     [B, L]
    TB, _ = x_ref.shape
    B = TB // T
    mm = matmul_dtype

    w_ih = wih_ref[...].astype(mm)
    w_hh = whh_ref[...].astype(mm)

    # Hoisted input projection: one MXU-friendly matmul, bias folded in.
    xw = (jnp.dot(x_ref[...].astype(mm), w_ih, preferred_element_type=jnp.float32)
          + b_ref[...])                                           # [T*B, 4H]

    h = jnp.zeros((B, H), jnp.float32)
    c = jnp.zeros((B, H), jnp.float32)
    for t in range(T):  # static unroll: T is small & known at trace time
        gates = (xw[t * B:(t + 1) * B, :]
                 + jnp.dot(h.astype(mm), w_hh, preferred_element_type=jnp.float32))
        # PyTorch gate order: i, f, g, o.  Gate elementwise stays f32 (v5e EUP/VPU).
        i_g = jax.nn.sigmoid(gates[:, 0 * H:1 * H])
        f_g = jax.nn.sigmoid(gates[:, 1 * H:2 * H])
        g_g = jnp.tanh(gates[:, 2 * H:3 * H])
        o_g = jax.nn.sigmoid(gates[:, 3 * H:4 * H])
        c = f_g * c + i_g * g_g
        h = o_g * jnp.tanh(c)
        outs_ref[:, t * H:(t + 1) * H] = h   # static lane offset into dense slab

    last_ref[...] = h

    # Fused head: [H, 2L] single matmul, then reparameterize in-kernel.
    head = (jnp.dot(h.astype(mm), whead_ref[...].astype(mm),
                    preferred_element_type=jnp.float32) + bhead_ref[...])   # [B, 2L]
    mulv_ref[...] = head
    z_ref[...] = eps_ref[...] * jnp.exp(0.5 * head[:, L:]) + head[:, :L]


def run_encoder_kernel(x2d, w_ih, w_hh, b, w_head, b_head, eps,
                       *, T, B, H, L, matmul_dtype):
    D = x2d.shape[1]
    vmem = pl.BlockSpec(memory_space=pltpu.MemorySpace.VMEM)

    flops = (2 * T * B * D * 4 * H      # input projection
             + 2 * T * B * H * 4 * H    # recurrent matmuls
             + 2 * B * H * 2 * L)       # head
    transcendentals = 5 * T * B * H + B * L
    bytes_accessed = 4 * (x2d.size + w_ih.size + w_hh.size + b.size
                          + w_head.size + b_head.size + eps.size
                          + B * T * H + B * H + B * 2 * L + B * L)

    kernel = functools.partial(lstm_encoder_kernel, T=T, H=H, L=L,
                               matmul_dtype=matmul_dtype)
    return pl.pallas_call(
        kernel,
        out_shape=(
            jax.ShapeDtypeStruct((B, T * H), jnp.float32),   # outs (packed)
            jax.ShapeDtypeStruct((B, H), jnp.float32),       # last
            jax.ShapeDtypeStruct((B, 2 * L), jnp.float32),   # mu | logvar
            jax.ShapeDtypeStruct((B, L), jnp.float32),       # z
        ),
        in_specs=[vmem] * 7,
        out_specs=(vmem, vmem, vmem, vmem),
        cost_estimate=pl.CostEstimate(flops=flops,
                                      transcendentals=transcendentals,
                                      bytes_accessed=bytes_accessed),
    )(x2d, w_ih, w_hh, b, w_head, b_head, eps)


# ------------------------------ full forward --------------------------------
def _pad_batch(x, b_pad):
    pad = b_pad - x.shape[0]
    if pad == 0:
        return x
    return jnp.pad(x, ((0, pad),) + ((0, 0),) * (x.ndim - 1))


@functools.partial(jax.jit, static_argnames=("domain", "use_bf16"))
def lstm_encoder_forward(params, x_tokens, eps, domain="src", use_bf16=False):
    emb_w = params["src_emb"] if domain == "src" else params["tgt_emb"]
    embedded = jnp.take(emb_w, x_tokens, axis=0)          # [B, T, D]  glue: gather
    # dropout is identity at inference

    B, T, D = embedded.shape
    H = params["w_hh"].shape[0]
    L = params["w_mu"].shape[1]
    B_pad = ((B + 7) // 8) * 8                            # f32 sublane multiple

    emb_p = _pad_batch(embedded, B_pad)                   # [B_pad, T, D]
    x2d = jnp.transpose(emb_p, (1, 0, 2)).reshape(T * B_pad, D)   # glue: layout
    eps_p = _pad_batch(eps, B_pad)                        # [B_pad, L]

    w_head = jnp.concatenate([params["w_mu"], params["w_lv"]], axis=1)   # [H, 2L]
    b_head = jnp.concatenate([params["b_mu"], params["b_lv"]], axis=1)   # [1, 2L]

    matmul_dtype = jnp.bfloat16 if use_bf16 else jnp.float32
    outs_packed, last, mulv, z = run_encoder_kernel(
        x2d, params["w_ih"], params["w_hh"], params["b"], w_head, b_head, eps_p,
        T=T, B=B_pad, H=H, L=L, matmul_dtype=matmul_dtype)

    outs = outs_packed[:B].reshape(B, T, H)               # no transpose needed
    return {"mu": mulv[:B, :L], "logvar": mulv[:B, L:], "z": z[:B],
            "outs": outs, "last": last[:B]}


# ------------------------------ reference -----------------------------------
def reference_forward(params, x_tokens, eps, domain="src"):
    emb_w = params["src_emb"] if domain == "src" else params["tgt_emb"]
    embedded = jnp.take(emb_w, x_tokens, axis=0)
    B, T, D = embedded.shape
    H = params["w_hh"].shape[0]
    h = jnp.zeros((B, H), jnp.float32)
    c = jnp.zeros((B, H), jnp.float32)
    outs = []
    for t in range(T):
        gates = embedded[:, t, :] @ params["w_ih"] + h @ params["w_hh"] + params["b"]
        i_g = jax.nn.sigmoid(gates[:, 0 * H:1 * H])
        f_g = jax.nn.sigmoid(gates[:, 1 * H:2 * H])
        g_g = jnp.tanh(gates[:, 2 * H:3 * H])
        o_g = jax.nn.sigmoid(gates[:, 3 * H:4 * H])
        c = f_g * c + i_g * g_g
        h = o_g * jnp.tanh(c)
        outs.append(h)
    outs = jnp.stack(outs, axis=1)
    mu = h @ params["w_mu"] + params["b_mu"]
    lv = h @ params["w_lv"] + params["b_lv"]
    z = eps * jnp.exp(0.5 * lv) + mu
    return {"mu": mu, "logvar": lv, "z": z, "outs": outs, "last": h}


# ------------------------------ main -----------------------------------------
if __name__ == "__main__":
    B, T = 2, 8
    VOCAB, D, H, L = 32, 16, 32, 16

    key = jax.random.PRNGKey(0)
    ks = jax.random.split(key, 12)

    s_lstm = 1.0 / jnp.sqrt(H)
    s_lin = 1.0 / jnp.sqrt(H)
    params = {
        "src_emb": jax.random.uniform(ks[0], (VOCAB, D), jnp.float32, -0.1, 0.1),
        "tgt_emb": jax.random.uniform(ks[1], (VOCAB, D), jnp.float32, -0.1, 0.1),
        "w_ih": jax.random.uniform(ks[2], (D, 4 * H), jnp.float32, -s_lstm, s_lstm),
        "w_hh": jax.random.uniform(ks[3], (H, 4 * H), jnp.float32, -s_lstm, s_lstm),
        "b": jax.random.uniform(ks[4], (1, 4 * H), jnp.float32, -s_lstm, s_lstm),
        "w_mu": jax.random.uniform(ks[5], (H, L), jnp.float32, -s_lin, s_lin),
        "b_mu": jax.random.uniform(ks[6], (1, L), jnp.float32, -s_lin, s_lin),
        "w_lv": jax.random.uniform(ks[7], (H, L), jnp.float32, -s_lin, s_lin),
        "b_lv": jax.random.uniform(ks[8], (1, L), jnp.float32, -s_lin, s_lin),
    }

    x_tokens = jax.random.randint(ks[9], (B, T), 0, VOCAB, dtype=jnp.int32)
    eps = jax.random.normal(ks[10], (B, L), jnp.float32)

    ref = reference_forward(params, x_tokens, eps, domain="src")

    # f32 matmul path (all generations) -- exact check.
    out = lstm_encoder_forward(params, x_tokens, eps, domain="src")
    out = jax.block_until_ready(out)
    for k in ("outs", "last", "mu", "logvar", "z"):
        assert jnp.allclose(out[k], ref[k], atol=1e-5, rtol=1e-5), k

    # bf16 matmul path (v6e/v7x MXU; f32 accumulation + f32 gates) -- loose check.
    out_bf16 = lstm_encoder_forward(params, x_tokens, eps, domain="src", use_bf16=True)
    out_bf16 = jax.block_until_ready(out_bf16)
    for k in ("outs", "last", "mu", "logvar", "z"):
        assert jnp.allclose(out_bf16[k], ref[k], atol=5e-2, rtol=5e-2), k

    print("KERNEL_OK")
</pallas_src>

<mosaic_0001>
module attributes {stable_mosaic.version = 11 : i64} {
  func.func @lstm_encoder_kernel(%arg0: memref<64x16xf32, #tpu.memory_space<vmem>>, %arg1: memref<16x128xf32, #tpu.memory_space<vmem>>, %arg2: memref<32x128xf32, #tpu.memory_space<vmem>>, %arg3: memref<1x128xf32, #tpu.memory_space<vmem>>, %arg4: memref<32x32xf32, #tpu.memory_space<vmem>>, %arg5: memref<1x32xf32, #tpu.memory_space<vmem>>, %arg6: memref<8x16xf32, #tpu.memory_space<vmem>>, %arg7: memref<8x256xf32, #tpu.memory_space<vmem>>, %arg8: memref<8x32xf32, #tpu.memory_space<vmem>>, %arg9: memref<8x32xf32, #tpu.memory_space<vmem>>, %arg10: memref<8x16xf32, #tpu.memory_space<vmem>>) attributes {dimension_semantics = [], scalar_prefetch = 0 : i64, scratch_operands = 0 : i64, tpu.core_type = #tpu.core_type<tc>} {
    %c0 = arith.constant 0 : index
    %c0_0 = arith.constant 0 : index
    %0 = vector.load %arg1[%c0, %c0_0] : memref<16x128xf32, #tpu.memory_space<vmem>>, vector<16x128xf32>
    %c0_1 = arith.constant 0 : index
    %c0_2 = arith.constant 0 : index
    %1 = vector.load %arg2[%c0_1, %c0_2] : memref<32x128xf32, #tpu.memory_space<vmem>>, vector<32x128xf32>
    %c0_3 = arith.constant 0 : index
    %c0_4 = arith.constant 0 : index
    %2 = vector.load %arg0[%c0_3, %c0_4] : memref<64x16xf32, #tpu.memory_space<vmem>>, vector<64x16xf32>
    %cst = arith.constant dense<0.000000e+00> : vector<64x128xf32>
    %3 = tpu.matmul %2, %0, %cst {dimension_numbers = #tpu.dot_dimension_numbers<[1], [0], [0], [1], [0, 0, 1, 1], [], []>} : vector<64x16xf32>, vector<16x128xf32>, vector<64x128xf32> -> vector<64x128xf32>
    %c0_5 = arith.constant 0 : index
    %c0_6 = arith.constant 0 : index
    %4 = vector.load %arg3[%c0_5, %c0_6] : memref<1x128xf32, #tpu.memory_space<vmem>>, vector<1x128xf32>
    %5 = vector.broadcast %4 : vector<1x128xf32> to vector<64x128xf32>
    %6 = arith.addf %3, %5 : vector<64x128xf32>
    %cst_7 = arith.constant 0.000000e+00 : f32
    %7 = vector.broadcast %cst_7 : f32 to vector<8x32xf32>
    %cst_8 = arith.constant 0.000000e+00 : f32
    %8 = vector.broadcast %cst_8 : f32 to vector<8x32xf32>
    %9 = vector.extract_strided_slice %6 {offsets = [0, 0], sizes = [8, 128], strides = [1, 1]} : vector<64x128xf32> to vector<8x128xf32>
    %cst_9 = arith.constant dense<0.000000e+00> : vector<8x128xf32>
    %10 = tpu.matmul %7, %1, %cst_9 {dimension_numbers = #tpu.dot_dimension_numbers<[1], [0], [0], [1], [0, 0, 1, 1], [], []>} : vector<8x32xf32>, vector<32x128xf32>, vector<8x128xf32> -> vector<8x128xf32>
    %11 = arith.addf %9, %10 : vector<8x128xf32>
    %12 = vector.extract_strided_slice %11 {offsets = [0, 0], sizes = [8, 32], strides = [1, 1]} : vector<8x128xf32> to vector<8x32xf32>
    %13 = arith.negf %12 : vector<8x32xf32>
    %14 = math.exp %13 : vector<8x32xf32>
    %cst_10 = arith.constant 1.000000e+00 : f32
    %15 = vector.broadcast %cst_10 : f32 to vector<8x32xf32>
    %16 = arith.addf %15, %14 : vector<8x32xf32>
    %17 = arith.divf %15, %16 : vector<8x32xf32>
    %18 = vector.extract_strided_slice %11 {offsets = [0, 32], sizes = [8, 32], strides = [1, 1]} : vector<8x128xf32> to vector<8x32xf32>
    %19 = arith.negf %18 : vector<8x32xf32>
    %20 = math.exp %19 : vector<8x32xf32>
    %cst_11 = arith.constant 1.000000e+00 : f32
    %21 = vector.broadcast %cst_11 : f32 to vector<8x32xf32>
    %22 = arith.addf %21, %20 : vector<8x32xf32>
    %23 = arith.divf %21, %22 : vector<8x32xf32>
    %24 = vector.extract_strided_slice %11 {offsets = [0, 64], sizes = [8, 32], strides = [1, 1]} : vector<8x128xf32> to vector<8x32xf32>
    %25 = math.tanh %24 : vector<8x32xf32>
    %26 = vector.extract_strided_slice %11 {offsets = [0, 96], sizes = [8, 32], strides = [1, 1]} : vector<8x128xf32> to vector<8x32xf32>
    %27 = arith.negf %26 : vector<8x32xf32>
    %28 = math.exp %27 : vector<8x32xf32>
    %cst_12 = arith.constant 1.000000e+00 : f32
    %29 = vector.broadcast %cst_12 : f32 to vector<8x32xf32>
    %30 = arith.addf %29, %28 : vector<8x32xf32>
    %31 = arith.divf %29, %30 : vector<8x32xf32>
    %32 = arith.mulf %23, %8 : vector<8x32xf32>
    %33 = arith.mulf %17, %25 : vector<8x32xf32>
    %34 = arith.addf %32, %33 : vector<8x32xf32>
    %35 = math.tanh %34 : vector<8x32xf32>
    %36 = arith.mulf %31, %35 : vector<8x32xf32>
    %c0_13 = arith.constant 0 : index
    %c0_14 = arith.constant 0 : index
    %37 = vector.load %arg7[%c0_13, %c0_14] : memref<8x256xf32, #tpu.memory_space<vmem>>, vector<8x32xf32>
    tpu.vector_store %arg7[%c0_13, %c0_14], %36 {strides = array<i32>} : memref<8x256xf32, #tpu.memory_space<vmem>>, vector<8x32xf32>,
    %38 = vector.extract_strided_slice %6 {offsets = [8, 0], sizes = [8, 128], strides = [1, 1]} : vector<64x128xf32> to vector<8x128xf32>
    %cst_15 = arith.constant dense<0.000000e+00> : vector<8x128xf32>
    %39 = tpu.matmul %36, %1, %cst_15 {dimension_numbers = #tpu.dot_dimension_numbers<[1], [0], [0], [1], [0, 0, 1, 1], [], []>} : vector<8x32xf32>, vector<32x128xf32>, vector<8x128xf32> -> vector<8x128xf32>
    %40 = arith.addf %38, %39 : vector<8x128xf32>
    %41 = vector.extract_strided_slice %40 {offsets = [0, 0], sizes = [8, 32], strides = [1, 1]} : vector<8x128xf32> to vector<8x32xf32>
    %42 = arith.negf %41 : vector<8x32xf32>
    %43 = math.exp %42 : vector<8x32xf32>
    %cst_16 = arith.constant 1.000000e+00 : f32
    %44 = vector.broadcast %cst_16 : f32 to vector<8x32xf32>
    %45 = arith.addf %44, %43 : vector<8x32xf32>
    %46 = arith.divf %44, %45 : vector<8x32xf32>
    %47 = vector.extract_strided_slice %40 {offsets = [0, 32], sizes = [8, 32], strides = [1, 1]} : vector<8x128xf32> to vector<8x32xf32>
    %48 = arith.negf %47 : vector<8x32xf32>
    %49 = math.exp %48 : vector<8x32xf32>
    %cst_17 = arith.constant 1.000000e+00 : f32
    %50 = vector.broadcast %cst_17 : f32 to vector<8x32xf32>
    %51 = arith.addf %50, %49 : vector<8x32xf32>
    %52 = arith.divf %50, %51 : vector<8x32xf32>
    %53 = vector.extract_strided_slice %40 {offsets = [0, 64], sizes = [8, 32], strides = [1, 1]} : vector<8x128xf32> to vector<8x32xf32>
    %54 = math.tanh %53 : vector<8x32xf32>
    %55 = vector.extract_strided_slice %40 {offsets = [0, 96], sizes = [8, 32], strides = [1, 1]} : vector<8x128xf32> to vector<8x32xf32>
    %56 = arith.negf %55 : vector<8x32xf32>
    %57 = math.exp %56 : vector<8x32xf32>
    %cst_18 = arith.constant 1.000000e+00 : f32
    %58 = vector.broadcast %cst_18 : f32 to vector<8x32xf32>
    %59 = arith.addf %58, %57 : vector<8x32xf32>
    %60 = arith.divf %58, %59 : vector<8x32xf32>
    %61 = arith.mulf %52, %34 : vector<8x32xf32>
    %62 = arith.mulf %46, %54 : vector<8x32xf32>
    %63 = arith.addf %61, %62 : vector<8x32xf32>
    %64 = math.tanh %63 : vector<8x32xf32>
    %65 = arith.mulf %60, %64 : vector<8x32xf32>
    %c0_19 = arith.constant 0 : index
    %c32 = arith.constant 32 : index
    %66 = vector.load %arg7[%c0_19, %c32] : memref<8x256xf32, #tpu.memory_space<vmem>>, vector<8x32xf32>
    tpu.vector_store %arg7[%c0_19, %c32], %65 {strides = array<i32>} : memref<8x256xf32, #tpu.memory_space<vmem>>, vector<8x32xf32>,
    %67 = vector.extract_strided_slice %6 {offsets = [16, 0], sizes = [8, 128], strides = [1, 1]} : vector<64x128xf32> to vector<8x128xf32>
    %cst_20 = arith.constant dense<0.000000e+00> : vector<8x128xf32>
    %68 = tpu.matmul %65, %1, %cst_20 {dimension_numbers = #tpu.dot_dimension_numbers<[1], [0], [0], [1], [0, 0, 1, 1], [], []>} : vector<8x32xf32>, vector<32x128xf32>, vector<8x128xf32> -> vector<8x128xf32>
    %69 = arith.addf %67, %68 : vector<8x128xf32>
    %70 = vector.extract_strided_slice %69 {offsets = [0, 0], sizes = [8, 32], strides = [1, 1]} : vector<8x128xf32> to vector<8x32xf32>
    %71 = arith.negf %70 : vector<8x32xf32>
    %72 = math.exp %71 : vector<8x32xf32>
    %cst_21 = arith.constant 1.000000e+00 : f32
    %73 = vector.broadcast %cst_21 : f32 to vector<8x32xf32>
    %74 = arith.addf %73, %72 : vector<8x32xf32>
    %75 = arith.divf %73, %74 : vector<8x32xf32>
    %76 = vector.extract_strided_slice %69 {offsets = [0, 32], sizes = [8, 32], strides = [1, 1]} : vector<8x128xf32> to vector<8x32xf32>
    %77 = arith.negf %76 : vector<8x32xf32>
    %78 = math.exp %77 : vector<8x32xf32>
    %cst_22 = arith.constant 1.000000e+00 : f32
    %79 = vector.broadcast %cst_22 : f32 to vector<8x32xf32>
    %80 = arith.addf %79, %78 : vector<8x32xf32>
    %81 = arith.divf %79, %80 : vector<8x32xf32>
    %82 = vector.extract_strided_slice %69 {offsets = [0, 64], sizes = [8, 32], strides = [1, 1]} : vector<8x128xf32> to vector<8x32xf32>
    %83 = math.tanh %82 : vector<8x32xf32>
    %84 = vector.extract_strided_slice %69 {offsets = [0, 96], sizes = [8, 32], strides = [1, 1]} : vector<8x128xf32> to vector<8x32xf32>
    %85 = arith.negf %84 : vector<8x32xf32>
    %86 = math.exp %85 : vector<8x32xf32>
    %cst_23 = arith.constant 1.000000e+00 : f32
    %87 = vector.broadcast %cst_23 : f32 to vector<8x32xf32>
    %88 = arith.addf %87, %86 : vector<8x32xf32>
    %89 = arith.divf %87, %88 : vector<8x32xf32>
    %90 = arith.mulf %81, %63 : vector<8x32xf32>
    %91 = arith.mulf %75, %83 : vector<8x32xf32>
    %92 = arith.addf %90, %91 : vector<8x32xf32>
    %93 = math.tanh %92 : vector<8x32xf32>
    %94 = arith.mulf %89, %93 : vector<8x32xf32>
    %c0_24 = arith.constant 0 : index
    %c64 = arith.constant 64 : index
    %95 = vector.load %arg7[%c0_24, %c64] : memref<8x256xf32, #tpu.memory_space<vmem>>, vector<8x32xf32>
    tpu.vector_store %arg7[%c0_24, %c64], %94 {strides = array<i32>} : memref<8x256xf32, #tpu.memory_space<vmem>>, vector<8x32xf32>,
    %96 = vector.extract_strided_slice %6 {offsets = [24, 0], sizes = [8, 128], strides = [1, 1]} : vector<64x128xf32> to vector<8x128xf32>
    %cst_25 = arith.constant dense<0.000000e+00> : vector<8x128xf32>
    %97 = tpu.matmul %94, %1, %cst_25 {dimension_numbers = #tpu.dot_dimension_numbers<[1], [0], [0], [1], [0, 0, 1, 1], [], []>} : vector<8x32xf32>, vector<32x128xf32>, vector<8x128xf32> -> vector<8x128xf32>
    %98 = arith.addf %96, %97 : vector<8x128xf32>
    %99 = vector.extract_strided_slice %98 {offsets = [0, 0], sizes = [8, 32], strides = [1, 1]} : vector<8x128xf32> to vector<8x32xf32>
    %100 = arith.negf %99 : vector<8x32xf32>
    %101 = math.exp %100 : vector<8x32xf32>
    %cst_26 = arith.constant 1.000000e+00 : f32
    %102 = vector.broadcast %cst_26 : f32 to vector<8x32xf32>
    %103 = arith.addf %102, %101 : vector<8x32xf32>
    %104 = arith.divf %102, %103 : vector<8x32xf32>
    %105 = vector.extract_strided_slice %98 {offsets = [0, 32], sizes = [8, 32], strides = [1, 1]} : vector<8x128xf32> to vector<8x32xf32>
    %106 = arith.negf %105 : vector<8x32xf32>
    %107 = math.exp %106 : vector<8x32xf32>
    %cst_27 = arith.constant 1.000000e+00 : f32
    %108 = vector.broadcast %cst_27 : f32 to vector<8x32xf32>
    %109 = arith.addf %108, %107 : vector<8x32xf32>
    %110 = arith.divf %108, %109 : vector<8x32xf32>
    %111 = vector.extract_strided_slice %98 {offsets = [0, 64], sizes = [8, 32], strides = [1, 1]} : vector<8x128xf32> to vector<8x32xf32>
    %112 = math.tanh %111 : vector<8x32xf32>
    %113 = vector.extract_strided_slice %98 {offsets = [0, 96], sizes = [8, 32], strides = [1, 1]} : vector<8x128xf32> to vector<8x32xf32>
    %114 = arith.negf %113 : vector<8x32xf32>
    %115 = math.exp %114 : vector<8x32xf32>
    %cst_28 = arith.constant 1.000000e+00 : f32
    %116 = vector.broadcast %cst_28 : f32 to vector<8x32xf32>
    %117 = arith.addf %116, %115 : vector<8x32xf32>
    %118 = arith.divf %116, %117 : vector<8x32xf32>
    %119 = arith.mulf %110, %92 : vector<8x32xf32>
    %120 = arith.mulf %104, %112 : vector<8x32xf32>
    %121 = arith.addf %119, %120 : vector<8x32xf32>
    %122 = math.tanh %121 : vector<8x32xf32>
    %123 = arith.mulf %118, %122 : vector<8x32xf32>
    %c0_29 = arith.constant 0 : index
    %c96 = arith.constant 96 : index
    %124 = vector.load %arg7[%c0_29, %c96] : memref<8x256xf32, #tpu.memory_space<vmem>>, vector<8x32xf32>
    tpu.vector_store %arg7[%c0_29, %c96], %123 {strides = array<i32>} : memref<8x256xf32, #tpu.memory_space<vmem>>, vector<8x32xf32>,
    %125 = vector.extract_strided_slice %6 {offsets = [32, 0], sizes = [8, 128], strides = [1, 1]} : vector<64x128xf32> to vector<8x128xf32>
    %cst_30 = arith.constant dense<0.000000e+00> : vector<8x128xf32>
    %126 = tpu.matmul %123, %1, %cst_30 {dimension_numbers = #tpu.dot_dimension_numbers<[1], [0], [0], [1], [0, 0, 1, 1], [], []>} : vector<8x32xf32>, vector<32x128xf32>, vector<8x128xf32> -> vector<8x128xf32>
    %127 = arith.addf %125, %126 : vector<8x128xf32>
    %128 = vector.extract_strided_slice %127 {offsets = [0, 0], sizes = [8, 32], strides = [1, 1]} : vector<8x128xf32> to vector<8x32xf32>
    %129 = arith.negf %128 : vector<8x32xf32>
    %130 = math.exp %129 : vector<8x32xf32>
    %cst_31 = arith.constant 1.000000e+00 : f32
    %131 = vector.broadcast %cst_31 : f32 to vector<8x32xf32>
    %132 = arith.addf %131, %130 : vector<8x32xf32>
    %133 = arith.divf %131, %132 : vector<8x32xf32>
    %134 = vector.extract_strided_slice %127 {offsets = [0, 32], sizes = [8, 32], strides = [1, 1]} : vector<8x128xf32> to vector<8x32xf32>
    %135 = arith.negf %134 : vector<8x32xf32>
    %136 = math.exp %135 : vector<8x32xf32>
    %cst_32 = arith.constant 1.000000e+00 : f32
    %137 = vector.broadcast %cst_32 : f32 to vector<8x32xf32>
    %138 = arith.addf %137, %136 : vector<8x32xf32>
    %139 = arith.divf %137, %138 : vector<8x32xf32>
    %140 = vector.extract_strided_slice %127 {offsets = [0, 64], sizes = [8, 32], strides = [1, 1]} : vector<8x128xf32> to vector<8x32xf32>
    %141 = math.tanh %140 : vector<8x32xf32>
    %142 = vector.extract_strided_slice %127 {offsets = [0, 96], sizes = [8, 32], strides = [1, 1]} : vector<8x128xf32> to vector<8x32xf32>
    %143 = arith.negf %142 : vector<8x32xf32>
    %144 = math.exp %143 : vector<8x32xf32>
    %cst_33 = arith.constant 1.000000e+00 : f32
    %145 = vector.broadcast %cst_33 : f32 to vector<8x32xf32>
    %146 = arith.addf %145, %144 : vector<8x32xf32>
    %147 = arith.divf %145, %146 : vector<8x32xf32>
    %148 = arith.mulf %139, %121 : vector<8x32xf32>
    %149 = arith.mulf %133, %141 : vector<8x32xf32>
    %150 = arith.addf %148, %149 : vector<8x32xf32>
    %151 = math.tanh %150 : vector<8x32xf32>
    %152 = arith.mulf %147, %151 : vector<8x32xf32>
    %c0_34 = arith.constant 0 : index
    %c128 = arith.constant 128 : index
    %153 = vector.load %arg7[%c0_34, %c128] : memref<8x256xf32, #tpu.memory_space<vmem>>, vector<8x32xf32>
    tpu.vector_store %arg7[%c0_34, %c128], %152 {strides = array<i32>} : memref<8x256xf32, #tpu.memory_space<vmem>>, vector<8x32xf32>,
    %154 = vector.extract_strided_slice %6 {offsets = [40, 0], sizes = [8, 128], strides = [1, 1]} : vector<64x128xf32> to vector<8x128xf32>
    %cst_35 = arith.constant dense<0.000000e+00> : vector<8x128xf32>
    %155 = tpu.matmul %152, %1, %cst_35 {dimension_numbers = #tpu.dot_dimension_numbers<[1], [0], [0], [1], [0, 0, 1, 1], [], []>} : vector<8x32xf32>, vector<32x128xf32>, vector<8x128xf32> -> vector<8x128xf32>
    %156 = arith.addf %154, %155 : vector<8x128xf32>
    %157 = vector.extract_strided_slice %156 {offsets = [0, 0], sizes = [8, 32], strides = [1, 1]} : vector<8x128xf32> to vector<8x32xf32>
    %158 = arith.negf %157 : vector<8x32xf32>
    %159 = math.exp %158 : vector<8x32xf32>
    %cst_36 = arith.constant 1.000000e+00 : f32
    %160 = vector.broadcast %cst_36 : f32 to vector<8x32xf32>
    %161 = arith.addf %160, %159 : vector<8x32xf32>
    %162 = arith.divf %160, %161 : vector<8x32xf32>
    %163 = vector.extract_strided_slice %156 {offsets = [0, 32], sizes = [8, 32], strides = [1, 1]} : vector<8x128xf32> to vector<8x32xf32>
    %164 = arith.negf %163 : vector<8x32xf32>
    %165 = math.exp %164 : vector<8x32xf32>
    %cst_37 = arith.constant 1.000000e+00 : f32
    %166 = vector.broadcast %cst_37 : f32 to vector<8x32xf32>
    %167 = arith.addf %166, %165 : vector<8x32xf32>
    %168 = arith.divf %166, %167 : vector<8x32xf32>
    %169 = vector.extract_strided_slice %156 {offsets = [0, 64], sizes = [8, 32], strides = [1, 1]} : vector<8x128xf32> to vector<8x32xf32>
    %170 = math.tanh %169 : vector<8x32xf32>
    %171 = vector.extract_strided_slice %156 {offsets = [0, 96], sizes = [8, 32], strides = [1, 1]} : vector<8x128xf32> to vector<8x32xf32>
    %172 = arith.negf %171 : vector<8x32xf32>
    %173 = math.exp %172 : vector<8x32xf32>
    %cst_38 = arith.constant 1.000000e+00 : f32
    %174 = vector.broadcast %cst_38 : f32 to vector<8x32xf32>
    %175 = arith.addf %174, %173 : vector<8x32xf32>
    %176 = arith.divf %174, %175 : vector<8x32xf32>
    %177 = arith.mulf %168, %150 : vector<8x32xf32>
    %178 = arith.mulf %162, %170 : vector<8x32xf32>
    %179 = arith.addf %177, %178 : vector<8x32xf32>
    %180 = math.tanh %179 : vector<8x32xf32>
    %181 = arith.mulf %176, %180 : vector<8x32xf32>
    %c0_39 = arith.constant 0 : index
    %c160 = arith.constant 160 : index
    %182 = vector.load %arg7[%c0_39, %c160] : memref<8x256xf32, #tpu.memory_space<vmem>>, vector<8x32xf32>
    tpu.vector_store %arg7[%c0_39, %c160], %181 {strides = array<i32>} : memref<8x256xf32, #tpu.memory_space<vmem>>, vector<8x32xf32>,
    %183 = vector.extract_strided_slice %6 {offsets = [48, 0], sizes = [8, 128], strides = [1, 1]} : vector<64x128xf32> to vector<8x128xf32>
    %cst_40 = arith.constant dense<0.000000e+00> : vector<8x128xf32>
    %184 = tpu.matmul %181, %1, %cst_40 {dimension_numbers = #tpu.dot_dimension_numbers<[1], [0], [0], [1], [0, 0, 1, 1], [], []>} : vector<8x32xf32>, vector<32x128xf32>, vector<8x128xf32> -> vector<8x128xf32>
    %185 = arith.addf %183, %184 : vector<8x128xf32>
    %186 = vector.extract_strided_slice %185 {offsets = [0, 0], sizes = [8, 32], strides = [1, 1]} : vector<8x128xf32> to vector<8x32xf32>
    %187 = arith.negf %186 : vector<8x32xf32>
    %188 = math.exp %187 : vector<8x32xf32>
    %cst_41 = arith.constant 1.000000e+00 : f32
    %189 = vector.broadcast %cst_41 : f32 to vector<8x32xf32>
    %190 = arith.addf %189, %188 : vector<8x32xf32>
    %191 = arith.divf %189, %190 : vector<8x32xf32>
    %192 = vector.extract_strided_slice %185 {offsets = [0, 32], sizes = [8, 32], strides = [1, 1]} : vector<8x128xf32> to vector<8x32xf32>
    %193 = arith.negf %192 : vector<8x32xf32>
    %194 = math.exp %193 : vector<8x32xf32>
    %cst_42 = arith.constant 1.000000e+00 : f32
    %195 = vector.broadcast %cst_42 : f32 to vector<8x32xf32>
    %196 = arith.addf %195, %194 : vector<8x32xf32>
    %197 = arith.divf %195, %196 : vector<8x32xf32>
    %198 = vector.extract_strided_slice %185 {offsets = [0, 64], sizes = [8, 32], strides = [1, 1]} : vector<8x128xf32> to vector<8x32xf32>
    %199 = math.tanh %198 : vector<8x32xf32>
    %200 = vector.extract_strided_slice %185 {offsets = [0, 96], sizes = [8, 32], strides = [1, 1]} : vector<8x128xf32> to vector<8x32xf32>
    %201 = arith.negf %200 : vector<8x32xf32>
    %202 = math.exp %201 : vector<8x32xf32>
    %cst_43 = arith.constant 1.000000e+00 : f32
    %203 = vector.broadcast %cst_43 : f32 to vector<8x32xf32>
    %204 = arith.addf %203, %202 : vector<8x32xf32>
    %205 = arith.divf %203, %204 : vector<8x32xf32>
    %206 = arith.mulf %197, %179 : vector<8x32xf32>
    %207 = arith.mulf %191, %199 : vector<8x32xf32>
    %208 = arith.addf %206, %207 : vector<8x32xf32>
    %209 = math.tanh %208 : vector<8x32xf32>
    %210 = arith.mulf %205, %209 : vector<8x32xf32>
    %c0_44 = arith.constant 0 : index
    %c192 = arith.constant 192 : index
    %211 = vector.load %arg7[%c0_44, %c192] : memref<8x256xf32, #tpu.memory_space<vmem>>, vector<8x32xf32>
    tpu.vector_store %arg7[%c0_44, %c192], %210 {strides = array<i32>} : memref<8x256xf32, #tpu.memory_space<vmem>>, vector<8x32xf32>,
    %212 = vector.extract_strided_slice %6 {offsets = [56, 0], sizes = [8, 128], strides = [1, 1]} : vector<64x128xf32> to vector<8x128xf32>
    %cst_45 = arith.constant dense<0.000000e+00> : vector<8x128xf32>
    %213 = tpu.matmul %210, %1, %cst_45 {dimension_numbers = #tpu.dot_dimension_numbers<[1], [0], [0], [1], [0, 0, 1, 1], [], []>} : vector<8x32xf32>, vector<32x128xf32>, vector<8x128xf32> -> vector<8x128xf32>
    %214 = arith.addf %212, %213 : vector<8x128xf32>
    %215 = vector.extract_strided_slice %214 {offsets = [0, 0], sizes = [8, 32], strides = [1, 1]} : vector<8x128xf32> to vector<8x32xf32>
    %216 = arith.negf %215 : vector<8x32xf32>
    %217 = math.exp %216 : vector<8x32xf32>
    %cst_46 = arith.constant 1.000000e+00 : f32
    %218 = vector.broadcast %cst_46 : f32 to vector<8x32xf32>
    %219 = arith.addf %218, %217 : vector<8x32xf32>
    %220 = arith.divf %218, %219 : vector<8x32xf32>
    %221 = vector.extract_strided_slice %214 {offsets = [0, 32], sizes = [8, 32], strides = [1, 1]} : vector<8x128xf32> to vector<8x32xf32>
    %222 = arith.negf %221 : vector<8x32xf32>
    %223 = math.exp %222 : vector<8x32xf32>
    %cst_47 = arith.constant 1.000000e+00 : f32
    %224 = vector.broadcast %cst_47 : f32 to vector<8x32xf32>
    %225 = arith.addf %224, %223 : vector<8x32xf32>
    %226 = arith.divf %224, %225 : vector<8x32xf32>
    %227 = vector.extract_strided_slice %214 {offsets = [0, 64], sizes = [8, 32], strides = [1, 1]} : vector<8x128xf32> to vector<8x32xf32>
    %228 = math.tanh %227 : vector<8x32xf32>
    %229 = vector.extract_strided_slice %214 {offsets = [0, 96], sizes = [8, 32], strides = [1, 1]} : vector<8x128xf32> to vector<8x32xf32>
    %230 = arith.negf %229 : vector<8x32xf32>
    %231 = math.exp %230 : vector<8x32xf32>
    %cst_48 = arith.constant 1.000000e+00 : f32
    %232 = vector.broadcast %cst_48 : f32 to vector<8x32xf32>
    %233 = arith.addf %232, %231 : vector<8x32xf32>
    %234 = arith.divf %232, %233 : vector<8x32xf32>
    %235 = arith.mulf %226, %208 : vector<8x32xf32>
    %236 = arith.mulf %220, %228 : vector<8x32xf32>
    %237 = arith.addf %235, %236 : vector<8x32xf32>
    %238 = math.tanh %237 : vector<8x32xf32>
    %239 = arith.mulf %234, %238 : vector<8x32xf32>
    %c0_49 = arith.constant 0 : index
    %c224 = arith.constant 224 : index
    %240 = vector.load %arg7[%c0_49, %c224] : memref<8x256xf32, #tpu.memory_space<vmem>>, vector<8x32xf32>
    tpu.vector_store %arg7[%c0_49, %c224], %239 {strides = array<i32>} : memref<8x256xf32, #tpu.memory_space<vmem>>, vector<8x32xf32>,
    %c0_50 = arith.constant 0 : index
    %c0_51 = arith.constant 0 : index
    %241 = vector.load %arg8[%c0_50, %c0_51] : memref<8x32xf32, #tpu.memory_space<vmem>>, vector<8x32xf32>
    tpu.vector_store %arg8[%c0_50, %c0_51], %239 {strides = array<i32>} : memref<8x32xf32, #tpu.memory_space<vmem>>, vector<8x32xf32>,
    %c0_52 = arith.constant 0 : index
    %c0_53 = arith.constant 0 : index
    %242 = vector.load %arg4[%c0_52, %c0_53] : memref<32x32xf32, #tpu.memory_space<vmem>>, vector<32x32xf32>
    %cst_54 = arith.constant dense<0.000000e+00> : vector<8x32xf32>
    %243 = tpu.matmul %239, %242, %cst_54 {dimension_numbers = #tpu.dot_dimension_numbers<[1], [0], [0], [1], [0, 0, 1, 1], [], []>} : vector<8x32xf32>, vector<32x32xf32>, vector<8x32xf32> -> vector<8x32xf32>
    %c0_55 = arith.constant 0 : index
    %c0_56 = arith.constant 0 : index
    %244 = vector.load %arg5[%c0_55, %c0_56] : memref<1x32xf32, #tpu.memory_space<vmem>>, vector<1x32xf32>
    %245 = vector.broadcast %244 : vector<1x32xf32> to vector<8x32xf32>
    %246 = arith.addf %243, %245 : vector<8x32xf32>
    %c0_57 = arith.constant 0 : index
    %c0_58 = arith.constant 0 : index
    %247 = vector.load %arg9[%c0_57, %c0_58] : memref<8x32xf32, #tpu.memory_space<vmem>>, vector<8x32xf32>
    tpu.vector_store %arg9[%c0_57, %c0_58], %246 {strides = array<i32>} : memref<8x32xf32, #tpu.memory_space<vmem>>, vector<8x32xf32>,
    %c0_59 = arith.constant 0 : index
    %c0_60 = arith.constant 0 : index
    %248 = vector.load %arg6[%c0_59, %c0_60] : memref<8x16xf32, #tpu.memory_space<vmem>>, vector<8x16xf32>
    %249 = vector.extract_strided_slice %246 {offsets = [0, 16], sizes = [8, 16], strides = [1, 1]} : vector<8x32xf32> to vector<8x16xf32>
    %cst_61 = arith.constant 5.000000e-01 : f32
    %250 = vector.broadcast %cst_61 : f32 to vector<8x16xf32>
    %251 = arith.mulf %250, %249 : vector<8x16xf32>
    %252 = math.exp %251 : vector<8x16xf32>
    %253 = arith.mulf %248, %252 : vector<8x16xf32>
    %254 = vector.extract_strided_slice %246 {offsets = [0, 0], sizes = [8, 16], strides = [1, 1]} : vector<8x32xf32> to vector<8x16xf32>
    %255 = arith.addf %253, %254 : vector<8x16xf32>
    %c0_62 = arith.constant 0 : index
    %c0_63 = arith.constant 0 : index
    %256 = vector.load %arg10[%c0_62, %c0_63] : memref<8x16xf32, #tpu.memory_space<vmem>>, vector<8x16xf32>
    tpu.vector_store %arg10[%c0_62, %c0_63], %255 {strides = array<i32>} : memref<8x16xf32, #tpu.memory_space<vmem>>, vector<8x16xf32>,
    return
  }
}

</mosaic_0001>

<llo_original>
// kernel: lstm_encoder_forward.1
$region0: #{lstm_encoder_forward.1}
  #allocation0 [shape = 'u32[]', space=smem, size = 0x4, offset = 0x4, fixed_abs, tag = 'smem constant byte address 0x4 - core index']
  #allocation1 [shape = 'u32[144,128]{1,0:T(1,128)}', space=vmem, size = 0x12000, scoped, tag = 'internal scratch']
  %s0 = inlined_call_operand.vmem [shape: f32[64,16], index: 0, kind: input, shape index: {}]
  %s1 = inlined_call_operand.vmem [shape: f32[16,128], index: 1, kind: input, shape index: {}]
  %s2 = inlined_call_operand.vmem [shape: f32[32,128], index: 2, kind: input, shape index: {}]
  %s3 = inlined_call_operand.vmem [shape: f32[1,128], index: 3, kind: input, shape index: {}]
  %s4 = inlined_call_operand.vmem [shape: f32[32,32], index: 4, kind: input, shape index: {}]
  %s5 = inlined_call_operand.vmem [shape: f32[1,32], index: 5, kind: input, shape index: {}]
  %s6 = inlined_call_operand.vmem [shape: f32[8,16], index: 6, kind: input, shape index: {}]
  %s7 = inlined_call_operand.vmem [shape: f32[8,256], index: 7, kind: output, shape index: {0}]
  %s8 = inlined_call_operand.vmem [shape: f32[8,32], index: 8, kind: output, shape index: {1}]
  %s9 = inlined_call_operand.vmem [shape: f32[8,32], index: 9, kind: output, shape index: {2}]
  %s10 = inlined_call_operand.vmem [shape: f32[8,16], index: 10, kind: output, shape index: {3}]
  %11 = xla_tuple %s7, %s8, %s9, %s10
  %s12 = sld [smem:[#allocation0]]
  $region62: #{lstm_encoder_forward.1} parent=0
    _
  %s14 = ssub.s32 1, %s12
  %s15 = scalar_select 0, %s14, %s12
  // Predicated region
  $region2: #{lstm_encoder_forward.1} parent=0 // pred_check
    _
  $region3: #{lstm_encoder_forward.1} parent=0 // pred_check_branch
    %17 = sbr.rel (0) target = $region5
  $region4: #{lstm_encoder_forward.1} parent=0 // pred_region
    _
  $region5: #{lstm_encoder_forward.1} parent=0 // pred_fallthru
    _
  // Predicated region
  $region6: #{lstm_encoder_forward.1} parent=0 // pred_check
    _
  $region7: #{lstm_encoder_forward.1} parent=0 // pred_check_branch
    %19 = sbr.rel (0) target = $region9
  $region8: #{lstm_encoder_forward.1} parent=0 // pred_region
    _
  $region9: #{lstm_encoder_forward.1} parent=0 // pred_fallthru
    _
  // Predicated region
  $region10: #{lstm_encoder_forward.1} parent=0 // pred_check
    _
  $region11: #{lstm_encoder_forward.1} parent=0 // pred_check_branch
    %21 = sbr.rel (0) target = $region13
  $region12: #{lstm_encoder_forward.1} parent=0 // pred_region
    _
  $region13: #{lstm_encoder_forward.1} parent=0 // pred_fallthru
    _
  // Predicated region
  $region14: #{lstm_encoder_forward.1} parent=0 // pred_check
    _
  $region15: #{lstm_encoder_forward.1} parent=0 // pred_check_branch
    %23 = sbr.rel (0) target = $region17
  $region16: #{lstm_encoder_forward.1} parent=0 // pred_region
    _
  $region17: #{lstm_encoder_forward.1} parent=0 // pred_fallthru
    _
  // Predicated region
  $region18: #{lstm_encoder_forward.1} parent=0 // pred_check
    _
  $region19: #{lstm_encoder_forward.1} parent=0 // pred_check_branch
    %25 = sbr.rel (0) target = $region21
  $region20: #{lstm_encoder_forward.1} parent=0 // pred_region
    _
  $region21: #{lstm_encoder_forward.1} parent=0 // pred_fallthru
    _
  // Predicated region
  $region22: #{lstm_encoder_forward.1} parent=0 // pred_check
    _
  $region23: #{lstm_encoder_forward.1} parent=0 // pred_check_branch
    %27 = sbr.rel (0) target = $region25
  $region24: #{lstm_encoder_forward.1} parent=0 // pred_region
    _
  $region25: #{lstm_encoder_forward.1} parent=0 // pred_fallthru
    _
  // Predicated region
  $region26: #{lstm_encoder_forward.1} parent=0 // pred_check
    _
  $region27: #{lstm_encoder_forward.1} parent=0 // pred_check_branch
    %29 = sbr.rel (0) target = $region29
  $region28: #{lstm_encoder_forward.1} parent=0 // pred_region
    _
  $region29: #{lstm_encoder_forward.1} parent=0 // pred_fallthru
    _
  %v30 = vld [vmem:[%s1] sm:$0xff]
  %v31 = vld [vmem:[%s1 + $0x8] sm:$0xff]
  %v32 = vld [vmem:[%s2] sm:$0xff]
  %v33 = vld [vmem:[%s2 + $0x8] sm:$0xff]
  %v34 = vld [vmem:[%s2 + $0x10] sm:$0xff]
  %v35 = vld [vmem:[%s2 + $0x18] sm:$0xff]
  %v36 = vld [vmem:[%s0] sm:$0xff]
  %v37 = vld [vmem:[%s0 + $0x8] sm:$0xff]
  %v38 = vld [vmem:[%s0 + $0x10] sm:$0xff]
  %v39 = vld [vmem:[%s0 + $0x18] sm:$0xff]
  %v40 = vld [vmem:[%s0 + $0x20] sm:$0xff]
  %v41 = vld [vmem:[%s0 + $0x28] sm:$0xff]
  %v42 = vld [vmem:[%s0 + $0x30] sm:$0xff]
  %v43 = vld [vmem:[%s0 + $0x38] sm:$0xff]
  %v44 = vld [vmem:[%s3] sm:$0x1]
  %v46 = vlaneseq
  %v47 = vshrl.u32 %v46, 7
  %v48 = vsub.s32 0, %v47
  %v49 = vrot.slane %v44, %v48
  %vm51 = vcmask 130048
  %v53 = vsel %vm51, %v36, 0
  %v56 = vsel %vm51, %v37, 0
  %v59 = vsel %vm51, %v38, 0
  %v62 = vsel %vm51, %v39, 0
  %v65 = vsel %vm51, %v40, 0
  %v68 = vsel %vm51, %v41, 0
  %v71 = vsel %vm51, %v42, 0
  %v74 = vsel %vm51, %v43, 0
  %76 = vmatprep.subr.mxu0 0.0
  %77 = vmatpush1.msra.mxu0 %v30
  %78 = vmatprep.subr.mxu0 0.0
  %79 = vmatpush1.msra.mxu0 %v31
  %80 = vmatprep.subr.mxu0 0.0
  %81 = vmatpush1.msra.mxu0 0.0
  %82 = vmatprep.subr.mxu0 0.0
  %83 = vmatpush1.msra.mxu0 0.0
  %84 = vmatprep.subr.mxu0 0.0
  %85 = vmatpush1.msra.mxu0 0.0
  %86 = vmatprep.subr.mxu0 0.0
  %87 = vmatpush1.msra.mxu0 0.0
  %88 = vmatprep.subr.mxu0 0.0
  %89 = vmatpush1.msra.mxu0 0.0
  %90 = vmatprep.subr.mxu0 0.0
  %91 = vmatpush1.msra.mxu0 0.0
  %92 = vmatprep.subr.mxu0 0.0
  %93 = vmatpush1.msra.mxu0 0.0
  %94 = vmatprep.subr.mxu0 0.0
  %95 = vmatpush1.msra.mxu0 0.0
  %96 = vmatprep.subr.mxu0 0.0
  %97 = vmatpush1.msra.mxu0 0.0
  %98 = vmatprep.subr.mxu0 0.0
  %99 = vmatpush1.msra.mxu0 0.0
  %100 = vmatprep.subr.mxu0 0.0
  %101 = vmatpush1.msra.mxu0 0.0
  %102 = vmatprep.subr.mxu0 0.0
  %103 = vmatpush1.msra.mxu0 0.0
  %104 = vmatprep.subr.mxu0 0.0
  %105 = vmatpush1.msra.mxu0 0.0
  %106 = vmatprep.subr.mxu0 0.0
  %107 = vmatpush1.msra.mxu0 0.0
  %108 = vmatprep.subr.mxu0 0.0
  %109 = vmatpush1.msra.mxu0 0.0
  %110 = vmatprep.subr.mxu0 0.0
  %111 = vmatpush1.msra.mxu0 0.0
  %112 = vmatprep.subr.mxu0 0.0
  %113 = vmatpush1.msra.mxu0 0.0
  %114 = vmatprep.subr.mxu0 0.0
  %115 = vmatpush1.msra.mxu0 0.0
  %116 = vmatprep.subr.mxu0 0.0
  %117 = vmatpush1.msra.mxu0 0.0
  %118 = vmatprep.subr.mxu0 0.0
  %119 = vmatpush1.msra.mxu0 0.0
  %120 = vmatprep.subr.mxu0 0.0
  %121 = vmatpush1.msra.mxu0 0.0
  %122 = vmatprep.subr.mxu0 0.0
  %123 = vmatpush1.msra.mxu0 0.0
  %124 = vmatprep.subr.mxu0 0.0
  %125 = vmatpush1.msra.mxu0 0.0
  %126 = vmatprep.subr.mxu0 0.0
  %127 = vmatpush1.msra.mxu0 0.0
  %128 = vmatprep.subr.mxu0 0.0
  %129 = vmatpush1.msra.mxu0 0.0
  %130 = vmatprep.subr.mxu0 0.0
  %131 = vmatpush1.msra.mxu0 0.0
  %132 = vmatprep.subr.mxu0 0.0
  %133 = vmatpush1.msra.mxu0 0.0
  %134 = vmatprep.subr.mxu0 0.0
  %135 = vmatpush1.msra.mxu0 0.0
  %136 = vmatprep.subr.mxu0 0.0
  %137 = vmatpush1.msra.mxu0 0.0
  %138 = vmatprep.subr.mxu0 0.0
  %139 = vmatpush1.msra.mxu0 0.0
  %140 = vmatprep.mubr.f32.mxu0 0.0
  %141 = vmatmul.mubr.f32.gmra.mrb[0].mxu0 %v53
  %v142 = vpop.f32.mrb[0].mxu0
  %v143 = vadd.f32 %v49, %v142
  %v144 = vpop.f32.mrb[0].mxu0
  %145 = vmatprep.mubr.f32.mxu0 0.0
  %146 = vmatmul.mubr.f32.gmra.mrb[0].mxu0 %v56
  %v147 = vpop.f32.mrb[0].mxu0
  %v148 = vadd.f32 %v49, %v147
  %v149 = vpop.f32.mrb[0].mxu0
  %150 = vmatprep.mubr.f32.mxu0 0.0
  %151 = vmatmul.mubr.f32.gmra.mrb[0].mxu0 %v59
  %v152 = vpop.f32.mrb[0].mxu0
  %v153 = vadd.f32 %v49, %v152
  %v154 = vpop.f32.mrb[0].mxu0
  %155 = vmatprep.mubr.f32.mxu0 0.0
  %156 = vmatmul.mubr.f32.gmra.mrb[0].mxu0 %v62
  %v157 = vpop.f32.mrb[0].mxu0
  %v158 = vadd.f32 %v49, %v157
  %v159 = vpop.f32.mrb[0].mxu0
  %160 = vmatprep.mubr.f32.mxu0 0.0
  %161 = vmatmul.mubr.f32.gmra.mrb[0].mxu0 %v65
  %v162 = vpop.f32.mrb[0].mxu0
  %v163 = vadd.f32 %v49, %v162
  %v164 = vpop.f32.mrb[0].mxu0
  %165 = vmatprep.mubr.f32.mxu0 0.0
  %166 = vmatmul.mubr.f32.gmra.mrb[0].mxu0 %v68
  %v167 = vpop.f32.mrb[0].mxu0
  %v168 = vadd.f32 %v49, %v167
  %v169 = vpop.f32.mrb[0].mxu0
  %170 = vmatprep.mubr.f32.mxu0 0.0
  %171 = vmatmul.mubr.f32.gmra.mrb[0].mxu0 %v71
  %v172 = vpop.f32.mrb[0].mxu0
  %v173 = vadd.f32 %v49, %v172
  %v174 = vpop.f32.mrb[0].mxu0
  %175 = vmatprep.mubr.f32.mxu0 0.0
  %176 = vmatmul.mubr.f32.gmra.mrb[0].mxu0 %v74
  %v177 = vpop.f32.mrb[0].mxu0
  %v178 = vadd.f32 %v49, %v177
  %v179 = vpop.f32.mrb[0].mxu0
  %180 = vdwg.mxu0
  %vm181 = vcmask 261120
  %v183 = vsel %vm181, 0.0, 0
  %185 = vmatprep.subr.mxu0 0.0
  %186 = vmatpush1.msra.mxu0 %v32
  %187 = vmatprep.subr.mxu0 0.0
  %188 = vmatpush1.msra.mxu0 %v33
  %189 = vmatprep.subr.mxu0 0.0
  %190 = vmatpush1.msra.mxu0 %v34
  %191 = vmatprep.subr.mxu0 0.0
  %192 = vmatpush1.msra.mxu0 %v35
  %193 = vmatprep.subr.mxu0 0.0
  %194 = vmatpush1.msra.mxu0 0.0
  %195 = vmatprep.subr.mxu0 0.0
  %196 = vmatpush1.msra.mxu0 0.0
  %197 = vmatprep.subr.mxu0 0.0
  %198 = vmatpush1.msra.mxu0 0.0
  %199 = vmatprep.subr.mxu0 0.0
  %200 = vmatpush1.msra.mxu0 0.0
  %201 = vmatprep.subr.mxu0 0.0
  %202 = vmatpush1.msra.mxu0 0.0
  %203 = vmatprep.subr.mxu0 0.0
  %204 = vmatpush1.msra.mxu0 0.0
  %205 = vmatprep.subr.mxu0 0.0
  %206 = vmatpush1.msra.mxu0 0.0
  %207 = vmatprep.subr.mxu0 0.0
  %208 = vmatpush1.msra.mxu0 0.0
  %209 = vmatprep.subr.mxu0 0.0
  %210 = vmatpush1.msra.mxu0 0.0
  %211 = vmatprep.subr.mxu0 0.0
  %212 = vmatpush1.msra.mxu0 0.0
  %213 = vmatprep.subr.mxu0 0.0
  %214 = vmatpush1.msra.mxu0 0.0
  %215 = vmatprep.subr.mxu0 0.0
  %216 = vmatpush1.msra.mxu0 0.0
  %217 = vmatprep.subr.mxu0 0.0
  %218 = vmatpush1.msra.mxu0 0.0
  %219 = vmatprep.subr.mxu0 0.0
  %220 = vmatpush1.msra.mxu0 0.0
  %221 = vmatprep.subr.mxu0 0.0
  %222 = vmatpush1.msra.mxu0 0.0
  %223 = vmatprep.subr.mxu0 0.0
  %224 = vmatpush1.msra.mxu0 0.0
  %225 = vmatprep.subr.mxu0 0.0
  %226 = vmatpush1.msra.mxu0 0.0
  %227 = vmatprep.subr.mxu0 0.0
  %228 = vmatpush1.msra.mxu0 0.0
  %229 = vmatprep.subr.mxu0 0.0
  %230 = vmatpush1.msra.mxu0 0.0
  %231 = vmatprep.subr.mxu0 0.0
  %232 = vmatpush1.msra.mxu0 0.0
  %233 = vmatprep.subr.mxu0 0.0
  %234 = vmatpush1.msra.mxu0 0.0
  %235 = vmatprep.subr.mxu0 0.0
  %236 = vmatpush1.msra.mxu0 0.0
  %237 = vmatprep.subr.mxu0 0.0
  %238 = vmatpush1.msra.mxu0 0.0
  %239 = vmatprep.subr.mxu0 0.0
  %240 = vmatpush1.msra.mxu0 0.0
  %241 = vmatprep.subr.mxu0 0.0
  %242 = vmatpush1.msra.mxu0 0.0
  %243 = vmatprep.subr.mxu0 0.0
  %244 = vmatpush1.msra.mxu0 0.0
  %245 = vmatprep.subr.mxu0 0.0
  %246 = vmatpush1.msra.mxu0 0.0
  %247 = vmatprep.subr.mxu0 0.0
  %248 = vmatpush1.msra.mxu0 0.0
  %249 = vmatprep.mubr.f32.mxu0 0.0
  %250 = vmatmul.mubr.f32.gmra.mrb[0].mxu0 %v183
  %v251 = vpop.f32.mrb[0].mxu0
  %v252 = vadd.f32 0.0, %v251
  %v253 = vpop.f32.mrb[0].mxu0
  %254 = vdwg.mxu0
  %v255 = vadd.f32 %v143, %v252
  %v256 = vxor.u32 %v255, 2147483648
  %v257 = vmul.f32 %v256, 1.442695
  %v258 = vpow.pop %v257
  %v259 = vadd.f32 %v258, 1.0
  %v260 = vrcp.pop %v259
  %v261 = vmul.f32 1.0, %v260
  %v262 = vtanh.pop %v255
  %v263 = vmul.f32 %v261, 0.0
  %265 = vrot.lane.b32.xlu0 %v262, 64
  %v266 = vpop.permute.xlu0 %265
  %v268 = vmul.f32 %v261, %v266
  %270 = vrot.lane.b32.xlu0 %v268, 32
  %v271 = vpop.permute.xlu0 %270
  %v273 = vadd.f32 %v263, %v271
  %v274 = vtanh.pop %v273
  %276 = vrot.lane.b32.xlu0 %v274, 64
  %v277 = vpop.permute.xlu0 %276
  %v279 = vmul.f32 %v261, %v277
  %281 = vrot.lane.b32.xlu0 %v279, 32
  %v282 = vpop.permute.xlu0 %281
  %284 = vst.msk [vmem:[%s7] sm:$0xff] %vm181, %v282
  %v285 = vsel %vm181, %v282, 0
  %287 = vmatprep.subr.mxu0 0.0
  %288 = vmatpush1.msra.mxu0 %v32
  %289 = vmatprep.subr.mxu0 0.0
  %290 = vmatpush1.msra.mxu0 %v33
  %291 = vmatprep.subr.mxu0 0.0
  %292 = vmatpush1.msra.mxu0 %v34
  %293 = vmatprep.subr.mxu0 0.0
  %294 = vmatpush1.msra.mxu0 %v35
  %295 = vmatprep.subr.mxu0 0.0
  %296 = vmatpush1.msra.mxu0 0.0
  %297 = vmatprep.subr.mxu0 0.0
  %298 = vmatpush1.msra.mxu0 0.0
  %299 = vmatprep.subr.mxu0 0.0
  %300 = vmatpush1.msra.mxu0 0.0
  %301 = vmatprep.subr.mxu0 0.0
  %302 = vmatpush1.msra.mxu0 0.0
  %303 = vmatprep.subr.mxu0 0.0
  %304 = vmatpush1.msra.mxu0 0.0
  %305 = vmatprep.subr.mxu0 0.0
  %306 = vmatpush1.msra.mxu0 0.0
  %307 = vmatprep.subr.mxu0 0.0
  %308 = vmatpush1.msra.mxu0 0.0
  %309 = vmatprep.subr.mxu0 0.0
  %310 = vmatpush1.msra.mxu0 0.0
  %311 = vmatprep.subr.mxu0 0.0
  %312 = vmatpush1.msra.mxu0 0.0
  %313 = vmatprep.subr.mxu0 0.0
  %314 = vmatpush1.msra.mxu0 0.0
  %315 = vmatprep.subr.mxu0 0.0
  %316 = vmatpush1.msra.mxu0 0.0
  %317 = vmatprep.subr.mxu0 0.0
  %318 = vmatpush1.msra.mxu0 0.0
  %319 = vmatprep.subr.mxu0 0.0
  %320 = vmatpush1.msra.mxu0 0.0
  %321 = vmatprep.subr.mxu0 0.0
  %322 = vmatpush1.msra.mxu0 0.0
  %323 = vmatprep.subr.mxu0 0.0
  %324 = vmatpush1.msra.mxu0 0.0
  %325 = vmatprep.subr.mxu0 0.0
  %326 = vmatpush1.msra.mxu0 0.0
  %327 = vmatprep.subr.mxu0 0.0
  %328 = vmatpush1.msra.mxu0 0.0
  %329 = vmatprep.subr.mxu0 0.0
  %330 = vmatpush1.msra.mxu0 0.0
  %331 = vmatprep.subr.mxu0 0.0
  %332 = vmatpush1.msra.mxu0 0.0
  %333 = vmatprep.subr.mxu0 0.0
  %334 = vmatpush1.msra.mxu0 0.0
  %335 = vmatprep.subr.mxu0 0.0
  %336 = vmatpush1.msra.mxu0 0.0
  %337 = vmatprep.subr.mxu0 0.0
  %338 = vmatpush1.msra.mxu0 0.0
  %339 = vmatprep.subr.mxu0 0.0
  %340 = vmatpush1.msra.mxu0 0.0
  %341 = vmatprep.subr.mxu0 0.0
  %342 = vmatpush1.msra.mxu0 0.0
  %343 = vmatprep.subr.mxu0 0.0
  %344 = vmatpush1.msra.mxu0 0.0
  %345 = vmatprep.subr.mxu0 0.0
  %346 = vmatpush1.msra.mxu0 0.0
  %347 = vmatprep.subr.mxu0 0.0
  %348 = vmatpush1.msra.mxu0 0.0
  %349 = vmatprep.subr.mxu0 0.0
  %350 = vmatpush1.msra.mxu0 0.0
  %351 = vmatprep.mubr.f32.mxu0 0.0
  %352 = vmatmul.mubr.f32.gmra.mrb[0].mxu0 %v285
  %v353 = vpop.f32.mrb[0].mxu0
  %v354 = vadd.f32 0.0, %v353
  %v355 = vpop.f32.mrb[0].mxu0
  %356 = vdwg.mxu0
  %v357 = vadd.f32 %v148, %v354
  %v358 = vxor.u32 %v357, 2147483648
  %v359 = vmul.f32 %v358, 1.442695
  %v360 = vpow.pop %v359
  %v361 = vadd.f32 %v360, 1.0
  %v362 = vrcp.pop %v361
  %v363 = vmul.f32 1.0, %v362
  %v364 = vtanh.pop %v357
  %v365 = vmul.f32 %v363, %v273
  %367 = vrot.lane.b32.xlu0 %v364, 64
  %v368 = vpop.permute.xlu0 %367
  %v370 = vmul.f32 %v363, %v368
  %372 = vrot.lane.b32.xlu0 %v370, 32
  %v373 = vpop.permute.xlu0 %372
  %v375 = vadd.f32 %v365, %v373
  %v376 = vtanh.pop %v375
  %378 = vrot.lane.b32.xlu0 %v376, 64
  %v379 = vpop.permute.xlu0 %378
  %v381 = vmul.f32 %v363, %v379
  %383 = vrot.lane.b32.xlu0 %v381, 64
  %v384 = vpop.permute.xlu0 %383
  %vm386 = vcmask 523520
  %387 = vst.msk [vmem:[%s7] sm:$0xff] %vm386, %v384
  %388 = vrot.lane.b32.xlu0 %v381, 32
  %v389 = vpop.permute.xlu0 %388
  %v390 = vsel %vm181, %v389, 0
  %392 = vmatprep.subr.mxu0 0.0
  %393 = vmatpush1.msra.mxu0 %v32
  %394 = vmatprep.subr.mxu0 0.0
  %395 = vmatpush1.msra.mxu0 %v33
  %396 = vmatprep.subr.mxu0 0.0
  %397 = vmatpush1.msra.mxu0 %v34
  %398 = vmatprep.subr.mxu0 0.0
  %399 = vmatpush1.msra.mxu0 %v35
  %400 = vmatprep.subr.mxu0 0.0
  %401 = vmatpush1.msra.mxu0 0.0
  %402 = vmatprep.subr.mxu0 0.0
  %403 = vmatpush1.msra.mxu0 0.0
  %404 = vmatprep.subr.mxu0 0.0
  %405 = vmatpush1.msra.mxu0 0.0
  %406 = vmatprep.subr.mxu0 0.0
  %407 = vmatpush1.msra.mxu0 0.0
  %408 = vmatprep.subr.mxu0 0.0
  %409 = vmatpush1.msra.mxu0 0.0
  %410 = vmatprep.subr.mxu0 0.0
  %411 = vmatpush1.msra.mxu0 0.0
  %412 = vmatprep.subr.mxu0 0.0
  %413 = vmatpush1.msra.mxu0 0.0
  %414 = vmatprep.subr.mxu0 0.0
  %415 = vmatpush1.msra.mxu0 0.0
  %416 = vmatprep.subr.mxu0 0.0
  %417 = vmatpush1.msra.mxu0 0.0
  %418 = vmatprep.subr.mxu0 0.0
  %419 = vmatpush1.msra.mxu0 0.0
  %420 = vmatprep.subr.mxu0 0.0
  %421 = vmatpush1.msra.mxu0 0.0
  %422 = vmatprep.subr.mxu0 0.0
  %423 = vmatpush1.msra.mxu0 0.0
  %424 = vmatprep.subr.mxu0 0.0
  %425 = vmatpush1.msra.mxu0 0.0
  %426 = vmatprep.subr.mxu0 0.0
  %427 = vmatpush1.msra.mxu0 0.0
  %428 = vmatprep.subr.mxu0 0.0
  %429 = vmatpush1.msra.mxu0 0.0
  %430 = vmatprep.subr.mxu0 0.0
  %431 = vmatpush1.msra.mxu0 0.0
  %432 = vmatprep.subr.mxu0 0.0
  %433 = vmatpush1.msra.mxu0 0.0
  %434 = vmatprep.subr.mxu0 0.0
  %435 = vmatpush1.msra.mxu0 0.0
  %436 = vmatprep.subr.mxu0 0.0
  %437 = vmatpush1.msra.mxu0 0.0
  %438 = vmatprep.subr.mxu0 0.0
  %439 = vmatpush1.msra.mxu0 0.0
  %440 = vmatprep.subr.mxu0 0.0
  %441 = vmatpush1.msra.mxu0 0.0
  %442 = vmatprep.subr.mxu0 0.0
  %443 = vmatpush1.msra.mxu0 0.0
  %444 = vmatprep.subr.mxu0 0.0
  %445 = vmatpush1.msra.mxu0 0.0
  %446 = vmatprep.subr.mxu0 0.0
  %447 = vmatpush1.msra.mxu0 0.0
  %448 = vmatprep.subr.mxu0 0.0
  %449 = vmatpush1.msra.mxu0 0.0
  %450 = vmatprep.subr.mxu0 0.0
  %451 = vmatpush1.msra.mxu0 0.0
  %452 = vmatprep.subr.mxu0 0.0
  %453 = vmatpush1.msra.mxu0 0.0
  %454 = vmatprep.subr.mxu0 0.0
  %455 = vmatpush1.msra.mxu0 0.0
  %456 = vmatprep.mubr.f32.mxu0 0.0
  %457 = vmatmul.mubr.f32.gmra.mrb[0].mxu0 %v390
  %v458 = vpop.f32.mrb[0].mxu0
  %v459 = vadd.f32 0.0, %v458
  %v460 = vpop.f32.mrb[0].mxu0
  %461 = vdwg.mxu0
  %v462 = vadd.f32 %v153, %v459
  %v463 = vxor.u32 %v462, 2147483648
  %v464 = vmul.f32 %v463, 1.442695
  %v465 = vpow.pop %v464
  %v466 = vadd.f32 %v465, 1.0
  %v467 = vrcp.pop %v466
  %v468 = vmul.f32 1.0, %v467
  %v469 = vtanh.pop %v462
  %v470 = vmul.f32 %v468, %v375
  %472 = vrot.lane.b32.xlu0 %v469, 64
  %v473 = vpop.permute.xlu0 %472
  %v475 = vmul.f32 %v468, %v473
  %477 = vrot.lane.b32.xlu0 %v475, 32
  %v478 = vpop.permute.xlu0 %477
  %v480 = vadd.f32 %v470, %v478
  %v481 = vtanh.pop %v480
  %483 = vrot.lane.b32.xlu0 %v481, 64
  %v484 = vpop.permute.xlu0 %483
  %v486 = vmul.f32 %v468, %v484
  %488 = vrot.lane.b32.xlu0 %v486, 96
  %v489 = vpop.permute.xlu0 %488
  %vm491 = vcmask 785920
  %492 = vst.msk [vmem:[%s7] sm:$0xff] %vm491, %v489
  %493 = vrot.lane.b32.xlu0 %v486, 32
  %v494 = vpop.permute.xlu0 %493
  %v495 = vsel %vm181, %v494, 0
  %497 = vmatprep.subr.mxu0 0.0
  %498 = vmatpush1.msra.mxu0 %v32
  %499 = vmatprep.subr.mxu0 0.0
  %500 = vmatpush1.msra.mxu0 %v33
  %501 = vmatprep.subr.mxu0 0.0
  %502 = vmatpush1.msra.mxu0 %v34
  %503 = vmatprep.subr.mxu0 0.0
  %504 = vmatpush1.msra.mxu0 %v35
  %505 = vmatprep.subr.mxu0 0.0
  %506 = vmatpush1.msra.mxu0 0.0
  %507 = vmatprep.subr.mxu0 0.0
  %508 = vmatpush1.msra.mxu0 0.0
  %509 = vmatprep.subr.mxu0 0.0
  %510 = vmatpush1.msra.mxu0 0.0
  %511 = vmatprep.subr.mxu0 0.0
  %512 = vmatpush1.msra.mxu0 0.0
  %513 = vmatprep.subr.mxu0 0.0
  %514 = vmatpush1.msra.mxu0 0.0
  %515 = vmatprep.subr.mxu0 0.0
  %516 = vmatpush1.msra.mxu0 0.0
  %517 = vmatprep.subr.mxu0 0.0
  %518 = vmatpush1.msra.mxu0 0.0
  %519 = vmatprep.subr.mxu0 0.0
  %520 = vmatpush1.msra.mxu0 0.0
  %521 = vmatprep.subr.mxu0 0.0
  %522 = vmatpush1.msra.mxu0 0.0
  %523 = vmatprep.subr.mxu0 0.0
  %524 = vmatpush1.msra.mxu0 0.0
  %525 = vmatprep.subr.mxu0 0.0
  %526 = vmatpush1.msra.mxu0 0.0
  %527 = vmatprep.subr.mxu0 0.0
  %528 = vmatpush1.msra.mxu0 0.0
  %529 = vmatprep.subr.mxu0 0.0
  %530 = vmatpush1.msra.mxu0 0.0
  %531 = vmatprep.subr.mxu0 0.0
  %532 = vmatpush1.msra.mxu0 0.0
  %533 = vmatprep.subr.mxu0 0.0
  %534 = vmatpush1.msra.mxu0 0.0
  %535 = vmatprep.subr.mxu0 0.0
  %536 = vmatpush1.msra.mxu0 0.0
  %537 = vmatprep.subr.mxu0 0.0
  %538 = vmatpush1.msra.mxu0 0.0
  %539 = vmatprep.subr.mxu0 0.0
  %540 = vmatpush1.msra.mxu0 0.0
  %541 = vmatprep.subr.mxu0 0.0
  %542 = vmatpush1.msra.mxu0 0.0
  %543 = vmatprep.subr.mxu0 0.0
  %544 = vmatpush1.msra.mxu0 0.0
  %545 = vmatprep.subr.mxu0 0.0
  %546 = vmatpush1.msra.mxu0 0.0
  %547 = vmatprep.subr.mxu0 0.0
  %548 = vmatpush1.msra.mxu0 0.0
  %549 = vmatprep.subr.mxu0 0.0
  %550 = vmatpush1.msra.mxu0 0.0
  %551 = vmatprep.subr.mxu0 0.0
  %552 = vmatpush1.msra.mxu0 0.0
  %553 = vmatprep.subr.mxu0 0.0
  %554 = vmatpush1.msra.mxu0 0.0
  %555 = vmatprep.subr.mxu0 0.0
  %556 = vmatpush1.msra.mxu0 0.0
  %557 = vmatprep.subr.mxu0 0.0
  %558 = vmatpush1.msra.mxu0 0.0
  %559 = vmatprep.subr.mxu0 0.0
  %560 = vmatpush1.msra.mxu0 0.0
  %561 = vmatprep.mubr.f32.mxu0 0.0
  %562 = vmatmul.mubr.f32.gmra.mrb[0].mxu0 %v495
  %v563 = vpop.f32.mrb[0].mxu0
  %v564 = vadd.f32 0.0, %v563
  %v565 = vpop.f32.mrb[0].mxu0
  %566 = vdwg.mxu0
  %v567 = vadd.f32 %v158, %v564
  %v568 = vxor.u32 %v567, 2147483648
  %v569 = vmul.f32 %v568, 1.442695
  %v570 = vpow.pop %v569
  %v571 = vadd.f32 %v570, 1.0
  %v572 = vrcp.pop %v571
  %v573 = vmul.f32 1.0, %v572
  %v574 = vtanh.pop %v567
  %v575 = vmul.f32 %v573, %v480
  %577 = vrot.lane.b32.xlu0 %v574, 64
  %v578 = vpop.permute.xlu0 %577
  %v580 = vmul.f32 %v573, %v578
  %582 = vrot.lane.b32.xlu0 %v580, 32
  %v583 = vpop.permute.xlu0 %582
  %v585 = vadd.f32 %v575, %v583
  %v586 = vtanh.pop %v585
  %588 = vrot.lane.b32.xlu0 %v586, 64
  %v589 = vpop.permute.xlu0 %588
  %v591 = vmul.f32 %v573, %v589
  %vm592 = vcmask 1048320
  %593 = vst.msk [vmem:[%s7] sm:$0xff] %vm592, %v591
  %595 = vrot.lane.b32.xlu0 %v591, 32
  %v596 = vpop.permute.xlu0 %595
  %v597 = vsel %vm181, %v596, 0
  %599 = vmatprep.subr.mxu0 0.0
  %600 = vmatpush1.msra.mxu0 %v32
  %601 = vmatprep.subr.mxu0 0.0
  %602 = vmatpush1.msra.mxu0 %v33
  %603 = vmatprep.subr.mxu0 0.0
  %604 = vmatpush1.msra.mxu0 %v34
  %605 = vmatprep.subr.mxu0 0.0
  %606 = vmatpush1.msra.mxu0 %v35
  %607 = vmatprep.subr.mxu0 0.0
  %608 = vmatpush1.msra.mxu0 0.0
  %609 = vmatprep.subr.mxu0 0.0
  %610 = vmatpush1.msra.mxu0 0.0
  %611 = vmatprep.subr.mxu0 0.0
  %612 = vmatpush1.msra.mxu0 0.0
  %613 = vmatprep.subr.mxu0 0.0
  %614 = vmatpush1.msra.mxu0 0.0
  %615 = vmatprep.subr.mxu0 0.0
  %616 = vmatpush1.msra.mxu0 0.0
  %617 = vmatprep.subr.mxu0 0.0
  %618 = vmatpush1.msra.mxu0 0.0
  %619 = vmatprep.subr.mxu0 0.0
  %620 = vmatpush1.msra.mxu0 0.0
  %621 = vmatprep.subr.mxu0 0.0
  %622 = vmatpush1.msra.mxu0 0.0
  %623 = vmatprep.subr.mxu0 0.0
  %624 = vmatpush1.msra.mxu0 0.0
  %625 = vmatprep.subr.mxu0 0.0
  %626 = vmatpush1.msra.mxu0 0.0
  %627 = vmatprep.subr.mxu0 0.0
  %628 = vmatpush1.msra.mxu0 0.0
  %629 = vmatprep.subr.mxu0 0.0
  %630 = vmatpush1.msra.mxu0 0.0
  %631 = vmatprep.subr.mxu0 0.0
  %632 = vmatpush1.msra.mxu0 0.0
  %633 = vmatprep.subr.mxu0 0.0
  %634 = vmatpush1.msra.mxu0 0.0
  %635 = vmatprep.subr.mxu0 0.0
  %636 = vmatpush1.msra.mxu0 0.0
  %637 = vmatprep.subr.mxu0 0.0
  %638 = vmatpush1.msra.mxu0 0.0
  %639 = vmatprep.subr.mxu0 0.0
  %640 = vmatpush1.msra.mxu0 0.0
  %641 = vmatprep.subr.mxu0 0.0
  %642 = vmatpush1.msra.mxu0 0.0
  %643 = vmatprep.subr.mxu0 0.0
  %644 = vmatpush1.msra.mxu0 0.0
  %645 = vmatprep.subr.mxu0 0.0
  %646 = vmatpush1.msra.mxu0 0.0
  %647 = vmatprep.subr.mxu0 0.0
  %648 = vmatpush1.msra.mxu0 0.0
  %649 = vmatprep.subr.mxu0 0.0
  %650 = vmatpush1.msra.mxu0 0.0
  %651 = vmatprep.subr.mxu0 0.0
  %652 = vmatpush1.msra.mxu0 0.0
  %653 = vmatprep.subr.mxu0 0.0
  %654 = vmatpush1.msra.mxu0 0.0
  %655 = vmatprep.subr.mxu0 0.0
  %656 = vmatpush1.msra.mxu0 0.0
  %657 = vmatprep.subr.mxu0 0.0
  %658 = vmatpush1.msra.mxu0 0.0
  %659 = vmatprep.subr.mxu0 0.0
  %660 = vmatpush1.msra.mxu0 0.0
  %661 = vmatprep.subr.mxu0 0.0
  %662 = vmatpush1.msra.mxu0 0.0
  %663 = vmatprep.mubr.f32.mxu0 0.0
  %664 = vmatmul.mubr.f32.gmra.mrb[0].mxu0 %v597
  %v665 = vpop.f32.mrb[0].mxu0
  %v666 = vadd.f32 0.0, %v665
  %v667 = vpop.f32.mrb[0].mxu0
  %668 = vdwg.mxu0
  %v669 = vadd.f32 %v163, %v666
  %v670 = vxor.u32 %v669, 2147483648
  %v671 = vmul.f32 %v670, 1.442695
  %v672 = vpow.pop %v671
  %v673 = vadd.f32 %v672, 1.0
  %v674 = vrcp.pop %v673
  %v675 = vmul.f32 1.0, %v674
  %v676 = vtanh.pop %v669
  %v677 = vmul.f32 %v675, %v585
  %679 = vrot.lane.b32.xlu0 %v676, 64
  %v680 = vpop.permute.xlu0 %679
  %v682 = vmul.f32 %v675, %v680
  %684 = vrot.lane.b32.xlu0 %v682, 32
  %v685 = vpop.permute.xlu0 %684
  %v687 = vadd.f32 %v677, %v685
  %v688 = vtanh.pop %v687
  %690 = vrot.lane.b32.xlu0 %v688, 64
  %v691 = vpop.permute.xlu0 %690
  %v693 = vmul.f32 %v675, %v691
  %695 = vrot.lane.b32.xlu0 %v693, 32
  %v696 = vpop.permute.xlu0 %695
  %698 = vst.msk [vmem:[%s7 + $0x8] sm:$0xff] %vm181, %v696
  %v699 = vsel %vm181, %v696, 0
  %701 = vmatprep.subr.mxu0 0.0
  %702 = vmatpush1.msra.mxu0 %v32
  %703 = vmatprep.subr.mxu0 0.0
  %704 = vmatpush1.msra.mxu0 %v33
  %705 = vmatprep.subr.mxu0 0.0
  %706 = vmatpush1.msra.mxu0 %v34
  %707 = vmatprep.subr.mxu0 0.0
  %708 = vmatpush1.msra.mxu0 %v35
  %709 = vmatprep.subr.mxu0 0.0
  %710 = vmatpush1.msra.mxu0 0.0
  %711 = vmatprep.subr.mxu0 0.0
  %712 = vmatpush1.msra.mxu0 0.0
  %713 = vmatprep.subr.mxu0 0.0
  %714 = vmatpush1.msra.mxu0 0.0
  %715 = vmatprep.subr.mxu0 0.0
  %716 = vmatpush1.msra.mxu0 0.0
  %717 = vmatprep.subr.mxu0 0.0
  %718 = vmatpush1.msra.mxu0 0.0
  %719 = vmatprep.subr.mxu0 0.0
  %720 = vmatpush1.msra.mxu0 0.0
  %721 = vmatprep.subr.mxu0 0.0
  %722 = vmatpush1.msra.mxu0 0.0
  %723 = vmatprep.subr.mxu0 0.0
  %724 = vmatpush1.msra.mxu0 0.0
  %725 = vmatprep.subr.mxu0 0.0
  %726 = vmatpush1.msra.mxu0 0.0
  %727 = vmatprep.subr.mxu0 0.0
  %728 = vmatpush1.msra.mxu0 0.0
  %729 = vmatprep.subr.mxu0 0.0
  %730 = vmatpush1.msra.mxu0 0.0
  %731 = vmatprep.subr.mxu0 0.0
  %732 = vmatpush1.msra.mxu0 0.0
  %733 = vmatprep.subr.mxu0 0.0
  %734 = vmatpush1.msra.mxu0 0.0
  %735 = vmatprep.subr.mxu0 0.0
  %736 = vmatpush1.msra.mxu0 0.0
  %737 = vmatprep.subr.mxu0 0.0
  %738 = vmatpush1.msra.mxu0 0.0
  %739 = vmatprep.subr.mxu0 0.0
  %740 = vmatpush1.msra.mxu0 0.0
  %741 = vmatprep.subr.mxu0 0.0
  %742 = vmatpush1.msra.mxu0 0.0
  %743 = vmatprep.subr.mxu0 0.0
  %744 = vmatpush1.msra.mxu0 0.0
  %745 = vmatprep.subr.mxu0 0.0
  %746 = vmatpush1.msra.mxu0 0.0
  %747 = vmatprep.subr.mxu0 0.0
  %748 = vmatpush1.msra.mxu0 0.0
  %749 = vmatprep.subr.mxu0 0.0
  %750 = vmatpush1.msra.mxu0 0.0
  %751 = vmatprep.subr.mxu0 0.0
  %752 = vmatpush1.msra.mxu0 0.0
  %753 = vmatprep.subr.mxu0 0.0
  %754 = vmatpush1.msra.mxu0 0.0
  %755 = vmatprep.subr.mxu0 0.0
  %756 = vmatpush1.msra.mxu0 0.0
  %757 = vmatprep.subr.mxu0 0.0
  %758 = vmatpush1.msra.mxu0 0.0
  %759 = vmatprep.subr.mxu0 0.0
  %760 = vmatpush1.msra.mxu0 0.0
  %761 = vmatprep.subr.mxu0 0.0
  %762 = vmatpush1.msra.mxu0 0.0
  %763 = vmatprep.subr.mxu0 0.0
  %764 = vmatpush1.msra.mxu0 0.0
  %765 = vmatprep.mubr.f32.mxu0 0.0
  %766 = vmatmul.mubr.f32.gmra.mrb[0].mxu0 %v699
  %v767 = vpop.f32.mrb[0].mxu0
  %v768 = vadd.f32 0.0, %v767
  %v769 = vpop.f32.mrb[0].mxu0
  %770 = vdwg.mxu0
  %v771 = vadd.f32 %v168, %v768
  %v772 = vxor.u32 %v771, 2147483648
  %v773 = vmul.f32 %v772, 1.442695
  %v774 = vpow.pop %v773
  %v775 = vadd.f32 %v774, 1.0
  %v776 = vrcp.pop %v775
  %v777 = vmul.f32 1.0, %v776
  %v778 = vtanh.pop %v771
  %v779 = vmul.f32 %v777, %v687
  %781 = vrot.lane.b32.xlu0 %v778, 64
  %v782 = vpop.permute.xlu0 %781
  %v784 = vmul.f32 %v777, %v782
  %786 = vrot.lane.b32.xlu0 %v784, 32
  %v787 = vpop.permute.xlu0 %786
  %v789 = vadd.f32 %v779, %v787
  %v790 = vtanh.pop %v789
  %792 = vrot.lane.b32.xlu0 %v790, 64
  %v793 = vpop.permute.xlu0 %792
  %v795 = vmul.f32 %v777, %v793
  %797 = vrot.lane.b32.xlu0 %v795, 64
  %v798 = vpop.permute.xlu0 %797
  %800 = vst.msk [vmem:[%s7 + $0x8] sm:$0xff] %vm386, %v798
  %801 = vrot.lane.b32.xlu0 %v795, 32
  %v802 = vpop.permute.xlu0 %801
  %v803 = vsel %vm181, %v802, 0
  %805 = vmatprep.subr.mxu0 0.0
  %806 = vmatpush1.msra.mxu0 %v32
  %807 = vmatprep.subr.mxu0 0.0
  %808 = vmatpush1.msra.mxu0 %v33
  %809 = vmatprep.subr.mxu0 0.0
  %810 = vmatpush1.msra.mxu0 %v34
  %811 = vmatprep.subr.mxu0 0.0
  %812 = vmatpush1.msra.mxu0 %v35
  %813 = vmatprep.subr.mxu0 0.0
  %814 = vmatpush1.msra.mxu0 0.0
  %815 = vmatprep.subr.mxu0 0.0
  %816 = vmatpush1.msra.mxu0 0.0
  %817 = vmatprep.subr.mxu0 0.0
  %818 = vmatpush1.msra.mxu0 0.0
  %819 = vmatprep.subr.mxu0 0.0
  %820 = vmatpush1.msra.mxu0 0.0
  %821 = vmatprep.subr.mxu0 0.0
  %822 = vmatpush1.msra.mxu0 0.0
  %823 = vmatprep.subr.mxu0 0.0
  %824 = vmatpush1.msra.mxu0 0.0
  %825 = vmatprep.subr.mxu0 0.0
  %826 = vmatpush1.msra.mxu0 0.0
  %827 = vmatprep.subr.mxu0 0.0
  %828 = vmatpush1.msra.mxu0 0.0
  %829 = vmatprep.subr.mxu0 0.0
  %830 = vmatpush1.msra.mxu0 0.0
  %831 = vmatprep.subr.mxu0 0.0
  %832 = vmatpush1.msra.mxu0 0.0
  %833 = vmatprep.subr.mxu0 0.0
  %834 = vmatpush1.msra.mxu0 0.0
  %835 = vmatprep.subr.mxu0 0.0
  %836 = vmatpush1.msra.mxu0 0.0
  %837 = vmatprep.subr.mxu0 0.0
  %838 = vmatpush1.msra.mxu0 0.0
  %839 = vmatprep.subr.mxu0 0.0
  %840 = vmatpush1.msra.mxu0 0.0
  %841 = vmatprep.subr.mxu0 0.0
  %842 = vmatpush1.msra.mxu0 0.0
  %843 = vmatprep.subr.mxu0 0.0
  %844 = vmatpush1.msra.mxu0 0.0
  %845 = vmatprep.subr.mxu0 0.0
  %846 = vmatpush1.msra.mxu0 0.0
  %847 = vmatprep.subr.mxu0 0.0
  %848 = vmatpush1.msra.mxu0 0.0
  %849 = vmatprep.subr.mxu0 0.0
  %850 = vmatpush1.msra.mxu0 0.0
  %851 = vmatprep.subr.mxu0 0.0
  %852 = vmatpush1.msra.mxu0 0.0
  %853 = vmatprep.subr.mxu0 0.0
  %854 = vmatpush1.msra.mxu0 0.0
  %855 = vmatprep.subr.mxu0 0.0
  %856 = vmatpush1.msra.mxu0 0.0
  %857 = vmatprep.subr.mxu0 0.0
  %858 = vmatpush1.msra.mxu0 0.0
  %859 = vmatprep.subr.mxu0 0.0
  %860 = vmatpush1.msra.mxu0 0.0
  %861 = vmatprep.subr.mxu0 0.0
  %862 = vmatpush1.msra.mxu0 0.0
  %863 = vmatprep.subr.mxu0 0.0
  %864 = vmatpush1.msra.mxu0 0.0
  %865 = vmatprep.subr.mxu0 0.0
  %866 = vmatpush1.msra.mxu0 0.0
  %867 = vmatprep.subr.mxu0 0.0
  %868 = vmatpush1.msra.mxu0 0.0
  %869 = vmatprep.mubr.f32.mxu0 0.0
  %870 = vmatmul.mubr.f32.gmra.mrb[0].mxu0 %v803
  %v871 = vpop.f32.mrb[0].mxu0
  %v872 = vadd.f32 0.0, %v871
  %v873 = vpop.f32.mrb[0].mxu0
  %874 = vdwg.mxu0
  %v875 = vadd.f32 %v173, %v872
  %v876 = vxor.u32 %v875, 2147483648
  %v877 = vmul.f32 %v876, 1.442695
  %v878 = vpow.pop %v877
  %v879 = vadd.f32 %v878, 1.0
  %v880 = vrcp.pop %v879
  %v881 = vmul.f32 1.0, %v880
  %v882 = vtanh.pop %v875
  %v883 = vmul.f32 %v881, %v789
  %885 = vrot.lane.b32.xlu0 %v882, 64
  %v886 = vpop.permute.xlu0 %885
  %v888 = vmul.f32 %v881, %v886
  %890 = vrot.lane.b32.xlu0 %v888, 32
  %v891 = vpop.permute.xlu0 %890
  %v893 = vadd.f32 %v883, %v891
  %v894 = vtanh.pop %v893
  %896 = vrot.lane.b32.xlu0 %v894, 64
  %v897 = vpop.permute.xlu0 %896
  %v899 = vmul.f32 %v881, %v897
  %901 = vrot.lane.b32.xlu0 %v899, 96
  %v902 = vpop.permute.xlu0 %901
  %904 = vst.msk [vmem:[%s7 + $0x8] sm:$0xff] %vm491, %v902
  %905 = vrot.lane.b32.xlu0 %v899, 32
  %v906 = vpop.permute.xlu0 %905
  %v907 = vsel %vm181, %v906, 0
  %909 = vmatprep.subr.mxu0 0.0
  %910 = vmatpush1.msra.mxu0 %v32
  %911 = vmatprep.subr.mxu0 0.0
  %912 = vmatpush1.msra.mxu0 %v33
  %913 = vmatprep.subr.mxu0 0.0
  %914 = vmatpush1.msra.mxu0 %v34
  %915 = vmatprep.subr.mxu0 0.0
  %916 = vmatpush1.msra.mxu0 %v35
  %917 = vmatprep.subr.mxu0 0.0
  %918 = vmatpush1.msra.mxu0 0.0
  %919 = vmatprep.subr.mxu0 0.0
  %920 = vmatpush1.msra.mxu0 0.0
  %921 = vmatprep.subr.mxu0 0.0
  %922 = vmatpush1.msra.mxu0 0.0
  %923 = vmatprep.subr.mxu0 0.0
  %924 = vmatpush1.msra.mxu0 0.0
  %925 = vmatprep.subr.mxu0 0.0
  %926 = vmatpush1.msra.mxu0 0.0
  %927 = vmatprep.subr.mxu0 0.0
  %928 = vmatpush1.msra.mxu0 0.0
  %929 = vmatprep.subr.mxu0 0.0
  %930 = vmatpush1.msra.mxu0 0.0
  %931 = vmatprep.subr.mxu0 0.0
  %932 = vmatpush1.msra.mxu0 0.0
  %933 = vmatprep.subr.mxu0 0.0
  %934 = vmatpush1.msra.mxu0 0.0
  %935 = vmatprep.subr.mxu0 0.0
  %936 = vmatpush1.msra.mxu0 0.0
  %937 = vmatprep.subr.mxu0 0.0
  %938 = vmatpush1.msra.mxu0 0.0
  %939 = vmatprep.subr.mxu0 0.0
  %940 = vmatpush1.msra.mxu0 0.0
  %941 = vmatprep.subr.mxu0 0.0
  %942 = vmatpush1.msra.mxu0 0.0
  %943 = vmatprep.subr.mxu0 0.0
  %944 = vmatpush1.msra.mxu0 0.0
  %945 = vmatprep.subr.mxu0 0.0
  %946 = vmatpush1.msra.mxu0 0.0
  %947 = vmatprep.subr.mxu0 0.0
  %948 = vmatpush1.msra.mxu0 0.0
  %949 = vmatprep.subr.mxu0 0.0
  %950 = vmatpush1.msra.mxu0 0.0
  %951 = vmatprep.subr.mxu0 0.0
  %952 = vmatpush1.msra.mxu0 0.0
  %953 = vmatprep.subr.mxu0 0.0
  %954 = vmatpush1.msra.mxu0 0.0
  %955 = vmatprep.subr.mxu0 0.0
  %956 = vmatpush1.msra.mxu0 0.0
  %957 = vmatprep.subr.mxu0 0.0
  %958 = vmatpush1.msra.mxu0 0.0
  %959 = vmatprep.subr.mxu0 0.0
  %960 = vmatpush1.msra.mxu0 0.0
  %961 = vmatprep.subr.mxu0 0.0
  %962 = vmatpush1.msra.mxu0 0.0
  %963 = vmatprep.subr.mxu0 0.0
  %964 = vmatpush1.msra.mxu0 0.0
  %965 = vmatprep.subr.mxu0 0.0
  %966 = vmatpush1.msra.mxu0 0.0
  %967 = vmatprep.subr.mxu0 0.0
  %968 = vmatpush1.msra.mxu0 0.0
  %969 = vmatprep.subr.mxu0 0.0
  %970 = vmatpush1.msra.mxu0 0.0
  %971 = vmatprep.subr.mxu0 0.0
  %972 = vmatpush1.msra.mxu0 0.0
  %973 = vmatprep.mubr.f32.mxu0 0.0
  %974 = vmatmul.mubr.f32.gmra.mrb[0].mxu0 %v907
  %v975 = vpop.f32.mrb[0].mxu0
  %v976 = vadd.f32 0.0, %v975
  %v977 = vpop.f32.mrb[0].mxu0
  %978 = vdwg.mxu0
  %v979 = vadd.f32 %v178, %v976
  %v980 = vxor.u32 %v979, 2147483648
  %v981 = vmul.f32 %v980, 1.442695
  %v982 = vpow.pop %v981
  %v983 = vadd.f32 %v982, 1.0
  %v984 = vrcp.pop %v983
  %v985 = vmul.f32 1.0, %v984
  %v986 = vtanh.pop %v979
  %v987 = vmul.f32 %v985, %v893
  %989 = vrot.lane.b32.xlu0 %v986, 64
  %v990 = vpop.permute.xlu0 %989
  %v992 = vmul.f32 %v985, %v990
  %994 = vrot.lane.b32.xlu0 %v992, 32
  %v995 = vpop.permute.xlu0 %994
  %v997 = vadd.f32 %v987, %v995
  %v998 = vtanh.pop %v997
  %1000 = vrot.lane.b32.xlu0 %v998, 64
  %v1001 = vpop.permute.xlu0 %1000
  %v1003 = vmul.f32 %v985, %v1001
  %1004 = vst.msk [vmem:[%s7 + $0x8] sm:$0xff] %vm592, %v1003
  %1006 = vrot.lane.b32.xlu0 %v1003, 32
  %v1007 = vpop.permute.xlu0 %1006
  %1009 = vst.msk [vmem:[%s8] sm:$0xff] %vm181, %v1007
  %v1010 = vld [vmem:[%s4] sm:$0xff]
  %v1011 = vld [vmem:[%s4 + $0x8] sm:$0xff]
  %v1012 = vld [vmem:[%s4 + $0x10] sm:$0xff]
  %v1013 = vld [vmem:[%s4 + $0x18] sm:$0xff]
  %v1014 = vld [vmem:[%s5] sm:$0x1]
  %v1016 = vlaneseq
  %v1017 = vshrl.u32 %v1016, 7
  %v1018 = vsub.s32 0, %v1017
  %v1019 = vrot.slane %v1014, %v1018
  %v1021 = vsel %vm181, %v1007, 0
  %1023 = vmatprep.subr.mxu0 0.0
  %1024 = vmatpush1.msra.mxu0 %v1010
  %1025 = vmatprep.subr.mxu0 0.0
  %1026 = vmatpush1.msra.mxu0 %v1011
  %1027 = vmatprep.subr.mxu0 0.0
  %1028 = vmatpush1.msra.mxu0 %v1012
  %1029 = vmatprep.subr.mxu0 0.0
  %1030 = vmatpush1.msra.mxu0 %v1013
  %1031 = vmatprep.subr.mxu0 0.0
  %1032 = vmatpush1.msra.mxu0 0.0
  %1033 = vmatprep.subr.mxu0 0.0
  %1034 = vmatpush1.msra.mxu0 0.0
  %1035 = vmatprep.subr.mxu0 0.0
  %1036 = vmatpush1.msra.mxu0 0.0
  %1037 = vmatprep.subr.mxu0 0.0
  %1038 = vmatpush1.msra.mxu0 0.0
  %1039 = vmatprep.subr.mxu0 0.0
  %1040 = vmatpush1.msra.mxu0 0.0
  %1041 = vmatprep.subr.mxu0 0.0
  %1042 = vmatpush1.msra.mxu0 0.0
  %1043 = vmatprep.subr.mxu0 0.0
  %1044 = vmatpush1.msra.mxu0 0.0
  %1045 = vmatprep.subr.mxu0 0.0
  %1046 = vmatpush1.msra.mxu0 0.0
  %1047 = vmatprep.subr.mxu0 0.0
  %1048 = vmatpush1.msra.mxu0 0.0
  %1049 = vmatprep.subr.mxu0 0.0
  %1050 = vmatpush1.msra.mxu0 0.0
  %1051 = vmatprep.subr.mxu0 0.0
  %1052 = vmatpush1.msra.mxu0 0.0
  %1053 = vmatprep.subr.mxu0 0.0
  %1054 = vmatpush1.msra.mxu0 0.0
  %1055 = vmatprep.subr.mxu0 0.0
  %1056 = vmatpush1.msra.mxu0 0.0
  %1057 = vmatprep.subr.mxu0 0.0
  %1058 = vmatpush1.msra.mxu0 0.0
  %1059 = vmatprep.subr.mxu0 0.0
  %1060 = vmatpush1.msra.mxu0 0.0
  %1061 = vmatprep.subr.mxu0 0.0
  %1062 = vmatpush1.msra.mxu0 0.0
  %1063 = vmatprep.subr.mxu0 0.0
  %1064 = vmatpush1.msra.mxu0 0.0
  %1065 = vmatprep.subr.mxu0 0.0
  %1066 = vmatpush1.msra.mxu0 0.0
  %1067 = vmatprep.subr.mxu0 0.0
  %1068 = vmatpush1.msra.mxu0 0.0
  %1069 = vmatprep.subr.mxu0 0.0
  %1070 = vmatpush1.msra.mxu0 0.0
  %1071 = vmatprep.subr.mxu0 0.0
  %1072 = vmatpush1.msra.mxu0 0.0
  %1073 = vmatprep.subr.mxu0 0.0
  %1074 = vmatpush1.msra.mxu0 0.0
  %1075 = vmatprep.subr.mxu0 0.0
  %1076 = vmatpush1.msra.mxu0 0.0
  %1077 = vmatprep.subr.mxu0 0.0
  %1078 = vmatpush1.msra.mxu0 0.0
  %1079 = vmatprep.subr.mxu0 0.0
  %1080 = vmatpush1.msra.mxu0 0.0
  %1081 = vmatprep.subr.mxu0 0.0
  %1082 = vmatpush1.msra.mxu0 0.0
  %1083 = vmatprep.subr.mxu0 0.0
  %1084 = vmatpush1.msra.mxu0 0.0
  %1085 = vmatprep.subr.mxu0 0.0
  %1086 = vmatpush1.msra.mxu0 0.0
  %1087 = vmatprep.mubr.f32.mxu0 0.0
  %1088 = vmatmul.mubr.f32.gmra.mrb[0].mxu0 %v1021
  %v1089 = vpop.f32.mrb[0].mxu0
  %v1090 = vadd.f32 %v1019, %v1089
  %v1091 = vpop.f32.mrb[0].mxu0
  %1092 = vdwg.mxu0
  %1093 = vst.msk [vmem:[%s9] sm:$0xff] %vm181, %v1090
  %v1094 = vld [vmem:[%s6] sm:$0xff]
  %v1095 = vmul.f32 %v1090, 0.5
  %v1096 = vmul.f32 %v1095, 1.442695
  %v1097 = vpow.pop %v1096
  %1099 = vrot.lane.b32.xlu0 %v1097, 112
  %v1100 = vpop.permute.xlu0 %1099
  %v1102 = vmul.f32 %v1094, %v1100
  %v1103 = vadd.f32 %v1102, %v1090
  %1104 = vst.msk [vmem:[%s10] sm:$0xff] %vm51, %v1103
  // Predicated region
  $region30: #{lstm_encoder_forward.1} parent=0 // pred_check
    _
  $region31: #{lstm_encoder_forward.1} parent=0 // pred_check_branch
    %1106 = sbr.rel (0) target = $region33
  $region32: #{lstm_encoder_forward.1} parent=0 // pred_region
    _
  $region33: #{lstm_encoder_forward.1} parent=0 // pred_fallthru
    _
  // Predicated region
  $region34: #{lstm_encoder_forward.1} parent=0 // pred_check
    _
  $region35: #{lstm_encoder_forward.1} parent=0 // pred_check_branch
    %1108 = sbr.rel (0) target = $region37
  $region36: #{lstm_encoder_forward.1} parent=0 // pred_region
    _
  $region37: #{lstm_encoder_forward.1} parent=0 // pred_fallthru
    _
  // Predicated region
  $region38: #{lstm_encoder_forward.1} parent=0 // pred_check
    _
  $region39: #{lstm_encoder_forward.1} parent=0 // pred_check_branch
    %1110 = sbr.rel (0) target = $region41
  $region40: #{lstm_encoder_forward.1} parent=0 // pred_region
    _
  $region41: #{lstm_encoder_forward.1} parent=0 // pred_fallthru
    _
  // Predicated region
  $region42: #{lstm_encoder_forward.1} parent=0 // pred_check
    _
  $region43: #{lstm_encoder_forward.1} parent=0 // pred_check_branch
    %1112 = sbr.rel (0) target = $region45
  $region44: #{lstm_encoder_forward.1} parent=0 // pred_region
    _
  $region45: #{lstm_encoder_forward.1} parent=0 // pred_fallthru
    _
  // Predicated region
  $region46: #{lstm_encoder_forward.1} parent=0 // pred_check
    _
  $region47: #{lstm_encoder_forward.1} parent=0 // pred_check_branch
    %1114 = sbr.rel (0) target = $region49
  $region48: #{lstm_encoder_forward.1} parent=0 // pred_region
    _
  $region49: #{lstm_encoder_forward.1} parent=0 // pred_fallthru
    _
  // Predicated region
  $region50: #{lstm_encoder_forward.1} parent=0 // pred_check
    _
  $region51: #{lstm_encoder_forward.1} parent=0 // pred_check_branch
    %1116 = sbr.rel (0) target = $region53
  $region52: #{lstm_encoder_forward.1} parent=0 // pred_region
    _
  $region53: #{lstm_encoder_forward.1} parent=0 // pred_fallthru
    _
  // Predicated region
  $region54: #{lstm_encoder_forward.1} parent=0 // pred_check
    _
  $region55: #{lstm_encoder_forward.1} parent=0 // pred_check_branch
    %1118 = sbr.rel (0) target = $region57
  $region56: #{lstm_encoder_forward.1} parent=0 // pred_region
    _
  $region57: #{lstm_encoder_forward.1} parent=0 // pred_fallthru
    _
  // Predicated region
  $region58: #{lstm_encoder_forward.1} parent=0 // pred_check
    _
  $region59: #{lstm_encoder_forward.1} parent=0 // pred_check_branch
    %1120 = sbr.rel (0) target = $region61
  $region60: #{lstm_encoder_forward.1} parent=0 // pred_region
    _
  $region61: #{lstm_encoder_forward.1} parent=0 // pred_fallthru
    _

</llo_original>
